<compile_context>
chip_gen: v6e
topology: v6e:2x2x1
jax: 0.10.0
libtpu: 0.0.40
codegen_flags: <defaults>
</compile_context>

<pallas_src>
import functools
import math

import jax
import jax.numpy as jnp
from jax import lax
from jax.experimental import pallas as pl
from jax.experimental.pallas import tpu as pltpu

EPS = 1e-5          # nn.BatchNorm1d default eps
NEG_SLOPE = 0.01    # nn.LeakyReLU default negative_slope


# ---------------------------------------------------------------------------
# tiling helpers
# ---------------------------------------------------------------------------
def _step_vmem_bytes(C, TL, HB, K, mm_bytes, act_bytes):
    """Rough per-grid-step VMEM footprint (double-buffered streams + temps)."""
    stream_in = C * TL * act_bytes + 2 * C * HB * act_bytes     # tile + halos
    stream_out = C * TL * act_bytes + C * 2 * 4                 # conv out + stats
    weights = K * C * C * mm_bytes
    temps = C * TL * (2 * 4 + 2 * mm_bytes)                     # f32 acc + shifted operands
    return 2 * (stream_in + stream_out) + 2 * weights + temps


def _pick_tiles(L, C, K, mm_bytes, act_bytes, tl_max=512, budget=20 * 2 ** 20):
    """Pick (TL, HB): L-tile width and halo-block width (both lane-legal)."""
    if L % 128 != 0 or L < 256 or tl_max < 128:
        return L, L                      # single L tile; halos masked at ends
    tl = 128
    for cand in (1024, 512, 256, 128):
        if cand <= tl_max and L % cand == 0:
            tl = cand
            break
    while (tl > 128 and tl % 256 == 0
           and _step_vmem_bytes(C, tl, 128, K, mm_bytes, act_bytes) > budget):
        tl //= 2
    return tl, 128


# ---------------------------------------------------------------------------
# in-kernel helpers
# ---------------------------------------------------------------------------
def _halo_cols(lh_ref, rh_ref, pad, fn):
    """Load the `pad` halo columns each side; zero them at true sequence ends.

    `fn` is applied to the raw halo columns *before* masking (for conv2 the
    zero-padding lives in the activation domain, so bn+lrelu must run first).
    """
    if pad == 0:
        return None, None
    t = pl.program_id(1)
    n_t = pl.num_programs(1)
    hb = lh_ref.shape[-1]
    lh = fn(lh_ref[:, hb - pad:])                       # (C, pad)
    rh = fn(rh_ref[:, :pad])                            # (C, pad)
    lh = jnp.where(t == 0, jnp.zeros_like(lh), lh)
    rh = jnp.where(t == n_t - 1, jnp.zeros_like(rh), rh)
    return lh, rh


def _conv_taps(x, lh, rh, w, K, pad, mm_dtype):
    """1-D 'same' conv as K accumulating MXU matmuls; f32 accumulation.

    x : (Cin, TL) f32 conv input tile
    lh/rh : (Cin, pad) f32 halo columns (already zeroed at sequence ends)
    w : (K, Cout, Cin) taps, already in mm_dtype
    """
    xm = x.astype(mm_dtype)
    if pad > 0:
        lh = lh.astype(mm_dtype)
        rh = rh.astype(mm_dtype)
    acc = None
    for k in range(K):
        d = k - pad
        if d == 0:
            xs = xm
        elif d < 0:
            xs = jnp.concatenate([lh[:, d:], xm[:, :d]], axis=1)
        else:
            xs = jnp.concatenate([xm[:, d:], rh[:, :d]], axis=1)
        part = jnp.dot(w[k], xs, preferred_element_type=jnp.float32)
        acc = part if acc is None else acc + part
    return acc                                          # (Cout, TL) f32


def _pack_stats(h, st_ref):
    """Per-channel (sum, sum-of-squares) over this tile packed as one (C,2) block."""
    s = jnp.sum(h, axis=1, keepdims=True)
    s2 = jnp.sum(h * h, axis=1, keepdims=True)
    st_ref[...] = jnp.concatenate([s, s2], axis=1)


# ---------------------------------------------------------------------------
# kernels
# ---------------------------------------------------------------------------
def _conv1_kernel(x_ref, lh_ref, rh_ref, w_ref, h_ref, st_ref, *, K, pad, mm_dtype):
    # conv1 (bias omitted: cancelled exactly by the following training-mode BN)
    lh, rh = _halo_cols(lh_ref, rh_ref, pad, fn=lambda v: v.astype(jnp.float32))
    h = _conv_taps(x_ref[...].astype(jnp.float32), lh, rh, w_ref[...], K, pad, mm_dtype)
    h_ref[...] = h.astype(h_ref.dtype)
    _pack_stats(h, st_ref)


def _bn_lrelu_conv2_kernel(h_ref, lh_ref, rh_ref, sc_ref, sh_ref, w_ref,
                           h2_ref, st_ref, *, K, pad, mm_dtype):
    sc = sc_ref[...]                                    # (C, 1) f32
    sh = sh_ref[...]

    def act(v):                                         # bn1 scale/shift + LeakyReLU (f32 VPU)
        a = v.astype(jnp.float32) * sc + sh
        return jnp.maximum(a, NEG_SLOPE * a)

    lh, rh = _halo_cols(lh_ref, rh_ref, pad, fn=act)
    h2 = _conv_taps(act(h_ref[...]), lh, rh, w_ref[...], K, pad, mm_dtype)
    h2_ref[...] = h2.astype(h2_ref.dtype)
    _pack_stats(h2, st_ref)


def _bn_res_lrelu_kernel(h2_ref, x_ref, sc_ref, sh_ref, o_ref):
    v = (h2_ref[...].astype(jnp.float32) * sc_ref[...] + sh_ref[...]
         + x_ref[...].astype(jnp.float32))
    o_ref[...] = jnp.maximum(v, NEG_SLOPE * v).astype(o_ref.dtype)


# ---------------------------------------------------------------------------
# host-side fold + wrapper
# ---------------------------------------------------------------------------
def _fold_bn(stats, gamma, beta, count):
    """(N, n_lt, C, 2) partial sums -> fused per-channel (scale, shift), each (C,1)."""
    tot = jnp.sum(stats, axis=(0, 1))                   # (C, 2) f32
    mean = tot[:, 0] / count
    # TODO(synk): one-pass E[x^2]-E[x]^2 can cancel for strongly offset channels
    # at very large N*L; a Welford-style combine would be safer there.
    var = jnp.maximum(tot[:, 1] / count - mean * mean, 0.0)
    scale = gamma.astype(jnp.float32) * lax.rsqrt(var + EPS)
    shift = beta.astype(jnp.float32) - mean * scale
    return scale[:, None], shift[:, None]


def basic_block(x_ncl, params, *, mm_dtype=jnp.bfloat16, act_dtype=None, tl_max=512):
    """BasicBlock forward. x_ncl: (N, C, L) in PyTorch Conv1d layout."""
    w1, b1, g1, be1, w2, b2, g2, be2 = params
    del b1, b2                      # cancel exactly under training-mode BN
    N, Cin, L = x_ncl.shape
    Cout, _, K = w1.shape
    assert Cin == Cout, "identity residual requires inplanes == planes"
    assert K % 2 == 1, "'same' conv path assumes odd kernel size"
    pad = K // 2
    act_dtype = act_dtype or mm_dtype          # HBM intermediate dtype

    x = x_ncl.astype(jnp.float32)
    # taps laid out (K, Cout, Cin) in the MXU operand dtype
    w1k = jnp.transpose(w1, (2, 0, 1)).astype(mm_dtype)
    w2k = jnp.transpose(w2, (2, 0, 1)).astype(mm_dtype)

    mm_b = jnp.dtype(mm_dtype).itemsize
    act_b = jnp.dtype(act_dtype).itemsize
    TL, HB = _pick_tiles(L, Cout, K, mm_b, act_b, tl_max=tl_max)
    n_lt = L // TL
    R = TL // HB                # halo blocks per L tile
    n_hb = L // HB

    vmem_est = _step_vmem_bytes(Cout, TL, HB, K, mm_b, max(act_b, 4))
    cp = pltpu.CompilerParams(
        dimension_semantics=("parallel", "parallel"),
        vmem_limit_bytes=int(min(max(2 * vmem_est, 32 * 2 ** 20), 64 * 2 ** 20)),
    )

    # BlockSpecs --------------------------------------------------------------
    def tile_spec(C):
        return pl.BlockSpec((None, C, TL), lambda b, t: (b, 0, t))

    lh_spec = pl.BlockSpec((None, Cin, HB),
                           lambda b, t: (b, 0, jnp.maximum(t * R - 1, 0)))
    rh_spec = pl.BlockSpec((None, Cin, HB),
                           lambda b, t: (b, 0, jnp.minimum((t + 1) * R, n_hb - 1)))
    w_spec = pl.BlockSpec((K, Cout, Cin), lambda b, t: (0, 0, 0))
    vec_spec = pl.BlockSpec((Cout, 1), lambda b, t: (0, 0))
    stat_spec = pl.BlockSpec((None, None, Cout, 2), lambda b, t: (b, t, 0, 0))

    act_shape = jax.ShapeDtypeStruct((N, Cout, L), act_dtype)
    stat_shape = jax.ShapeDtypeStruct((N, n_lt, Cout, 2), jnp.float32)
    out_shape = jax.ShapeDtypeStruct((N, Cout, L), x_ncl.dtype)
    grid = (N, n_lt)

    # --- stage 1: conv1 + bn1 partial stats ----------------------------------
    h1, st1 = pl.pallas_call(
        functools.partial(_conv1_kernel, K=K, pad=pad, mm_dtype=mm_dtype),
        grid=grid,
        in_specs=[tile_spec(Cin), lh_spec, rh_spec, w_spec],
        out_specs=(tile_spec(Cout), stat_spec),
        out_shape=(act_shape, stat_shape),
        compiler_params=cp,
    )(x, x, x, w1k)
    sc1, sh1 = _fold_bn(st1, g1, be1, N * L)

    # --- stage 2: bn1 apply + LeakyReLU + conv2 + bn2 partial stats ----------
    h2, st2 = pl.pallas_call(
        functools.partial(_bn_lrelu_conv2_kernel, K=K, pad=pad, mm_dtype=mm_dtype),
        grid=grid,
        in_specs=[tile_spec(Cout), lh_spec, rh_spec, vec_spec, vec_spec, w_spec],
        out_specs=(tile_spec(Cout), stat_spec),
        out_shape=(act_shape, stat_shape),
        compiler_params=cp,
    )(h1, h1, h1, sc1, sh1, w2k)
    sc2, sh2 = _fold_bn(st2, g2, be2, N * L)

    # --- stage 3: bn2 apply + identity residual + LeakyReLU ------------------
    out = pl.pallas_call(
        _bn_res_lrelu_kernel,
        grid=grid,
        in_specs=[tile_spec(Cout), tile_spec(Cin), vec_spec, vec_spec],
        out_specs=tile_spec(Cout),
        out_shape=out_shape,
        compiler_params=cp,
    )(h2, x, sc2, sh2)
    return out


# ---------------------------------------------------------------------------
# pure-JAX reference (original module semantics, biases included)
# ---------------------------------------------------------------------------
def ref_basic_block(x, params):
    w1, b1, g1, be1, w2, b2, g2, be2 = params
    dn = ('NCH', 'OIH', 'NCH')

    def conv(v, w, b):
        p = w.shape[2] // 2
        y = lax.conv_general_dilated(v, w, window_strides=(1,),
                                     padding=[(p, p)], dimension_numbers=dn)
        return y + b[None, :, None]

    def bn(v, g, be):
        m = jnp.mean(v, axis=(0, 2), keepdims=True)
        var = jnp.mean((v - m) ** 2, axis=(0, 2), keepdims=True)
        return (v - m) * lax.rsqrt(var + EPS) * g[None, :, None] + be[None, :, None]

    lrelu = lambda v: jnp.where(v > 0, v, NEG_SLOPE * v)
    out = lrelu(bn(conv(x, w1, b1), g1, be1))
    out = bn(conv(out, w2, b2), g2, be2)
    return lrelu(out + x)


def make_params(key, inplanes, planes, kernel_size=3):
    k0, k1, k2, k3 = jax.random.split(key, 4)
    s1 = 1.0 / math.sqrt(inplanes * kernel_size)
    s2 = 1.0 / math.sqrt(planes * kernel_size)
    w1 = jax.random.uniform(k0, (planes, inplanes, kernel_size), jnp.float32, -s1, s1)
    b1 = jax.random.uniform(k1, (planes,), jnp.float32, -s1, s1)
    w2 = jax.random.uniform(k2, (planes, planes, kernel_size), jnp.float32, -s2, s2)
    b2 = jax.random.uniform(k3, (planes,), jnp.float32, -s2, s2)
    g1 = jnp.ones((planes,), jnp.float32)
    be1 = jnp.zeros((planes,), jnp.float32)
    g2 = jnp.ones((planes,), jnp.float32)
    be2 = jnp.zeros((planes,), jnp.float32)
    return (w1, b1, g1, be1, w2, b2, g2, be2)


if __name__ == "__main__":
    key = jax.random.PRNGKey(0)
    kx, kp, kx2, kp2 = jax.random.split(key, 4)

    # Small shape (single L tile path).
    N, C, L = 2, 8, 16
    x = jax.random.normal(kx, (N, C, L), jnp.float32)
    params = make_params(kp, inplanes=C, planes=C, kernel_size=3)
    ref = ref_basic_block(x, params)

    # f32 MXU operands: exact-path check against the reference.
    out_f32 = jax.block_until_ready(
        jax.jit(functools.partial(basic_block, mm_dtype=jnp.float32))(x, params))
    assert out_f32.shape == (N, C, L)
    err = float(jnp.max(jnp.abs(out_f32 - ref)))
    assert jnp.allclose(out_f32, ref, atol=1e-3, rtol=1e-3), f"f32 max abs err = {err}"

    # bf16 MXU operands + bf16 HBM intermediates (perf config): looser check.
    out_bf16 = jax.block_until_ready(
        jax.jit(functools.partial(basic_block, mm_dtype=jnp.bfloat16))(x, params))
    err_bf = float(jnp.max(jnp.abs(out_bf16 - ref)))
    assert jnp.allclose(out_bf16, ref, atol=3e-2, rtol=3e-2), f"bf16 max abs err = {err_bf}"

    # Moderate shape that exercises the L-tiling + halo path (2 tiles of 256).
    N2, C2, L2 = 2, 16, 512
    x2 = jax.random.normal(kx2, (N2, C2, L2), jnp.float32)
    params2 = make_params(kp2, inplanes=C2, planes=C2, kernel_size=3)
    ref2 = ref_basic_block(x2, params2)
    out2 = jax.block_until_ready(
        jax.jit(functools.partial(basic_block, mm_dtype=jnp.float32, tl_max=256))(x2, params2))
    err2 = float(jnp.max(jnp.abs(out2 - ref2)))
    assert jnp.allclose(out2, ref2, atol=1e-3, rtol=1e-3), f"tiled f32 max abs err = {err2}"

    print("KERNEL_OK")
</pallas_src>

<mosaic_0001>
module attributes {stable_mosaic.version = 11 : i64} {
  func.func @_conv1_kernel(%arg0: i32, %arg1: i32, %arg2: memref<1x8x16xf32, #tpu.memory_space<vmem>>, %arg3: memref<1x8x16xf32, #tpu.memory_space<vmem>>, %arg4: memref<1x8x16xf32, #tpu.memory_space<vmem>>, %arg5: memref<3x8x8xf32, #tpu.memory_space<vmem>>, %arg6: memref<1x8x16xf32, #tpu.memory_space<vmem>>, %arg7: memref<1x1x8x2xf32, #tpu.memory_space<vmem>>) attributes {dimension_semantics = [#tpu.dimension_semantics<parallel>, #tpu.dimension_semantics<parallel>], iteration_bounds = array<i64: 2, 1>, scalar_prefetch = 0 : i64, scratch_operands = 0 : i64, tpu.core_type = #tpu.core_type<tc>, window_params = [{transform_indices = @transform_0, window_bounds = array<i64: 1, 8, 16>}, {transform_indices = @transform_1, window_bounds = array<i64: 1, 8, 16>}, {transform_indices = @transform_2, window_bounds = array<i64: 1, 8, 16>}, {pipeline_mode = #tpu.pipeline_mode<synchronous>, transform_indices = @transform_3, window_bounds = array<i64: 3, 8, 8>}, {transform_indices = @transform_4, window_bounds = array<i64: 1, 8, 16>}, {transform_indices = @transform_5, window_bounds = array<i64: 1, 1, 8, 2>}]} {
    %c0 = arith.constant 0 : index
    %c0_0 = arith.constant 0 : index
    %c15 = arith.constant 15 : index
    %0 = vector.load %arg3[%c0, %c0_0, %c15] : memref<1x8x16xf32, #tpu.memory_space<vmem>>, vector<1x8x1xf32>
    %1 = vector.shape_cast %0 : vector<1x8x1xf32> to vector<8x1xf32>
    %c0_1 = arith.constant 0 : index
    %c0_2 = arith.constant 0 : index
    %c0_3 = arith.constant 0 : index
    %2 = vector.load %arg4[%c0_1, %c0_2, %c0_3] : memref<1x8x16xf32, #tpu.memory_space<vmem>>, vector<1x8x1xf32>
    %3 = vector.shape_cast %2 : vector<1x8x1xf32> to vector<8x1xf32>
    %c0_i32 = arith.constant 0 : i32
    %4 = arith.cmpi eq, %arg1, %c0_i32 : i32
    %cst = arith.constant 0.000000e+00 : f32
    %5 = vector.broadcast %cst : f32 to vector<8x1xf32>
    %6 = arith.select %4, %5, %1 : vector<8x1xf32>
    %c0_i32_4 = arith.constant 0 : i32
    %7 = arith.cmpi eq, %arg1, %c0_i32_4 : i32
    %cst_5 = arith.constant 0.000000e+00 : f32
    %8 = vector.broadcast %cst_5 : f32 to vector<8x1xf32>
    %9 = arith.select %7, %8, %3 : vector<8x1xf32>
    %c0_6 = arith.constant 0 : index
    %c0_7 = arith.constant 0 : index
    %c0_8 = arith.constant 0 : index
    %10 = vector.load %arg2[%c0_6, %c0_7, %c0_8] : memref<1x8x16xf32, #tpu.memory_space<vmem>>, vector<1x8x16xf32>
    %11 = vector.shape_cast %10 : vector<1x8x16xf32> to vector<8x16xf32>
    %c0_9 = arith.constant 0 : index
    %c0_10 = arith.constant 0 : index
    %c0_11 = arith.constant 0 : index
    %12 = vector.load %arg5[%c0_9, %c0_10, %c0_11] : memref<3x8x8xf32, #tpu.memory_space<vmem>>, vector<3x8x8xf32>
    %13 = vector.extract_strided_slice %11 {offsets = [0, 0], sizes = [8, 15], strides = [1, 1]} : vector<8x16xf32> to vector<8x15xf32>
    %14 = tpu.concatenate %6, %13 in 1 : vector<8x1xf32>, vector<8x15xf32> -> vector<8x16xf32>
    %15 = vector.extract_strided_slice %12 {offsets = [0, 0, 0], sizes = [1, 8, 8], strides = [1, 1, 1]} : vector<3x8x8xf32> to vector<1x8x8xf32>
    %16 = vector.shape_cast %15 : vector<1x8x8xf32> to vector<8x8xf32>
    %cst_12 = arith.constant dense<0.000000e+00> : vector<8x16xf32>
    %17 = tpu.matmul %16, %14, %cst_12 {dimension_numbers = #tpu.dot_dimension_numbers<[1], [0], [0], [1], [0, 0, 1, 1], [], []>} : vector<8x8xf32>, vector<8x16xf32>, vector<8x16xf32> -> vector<8x16xf32>
    %18 = vector.extract_strided_slice %12 {offsets = [1, 0, 0], sizes = [1, 8, 8], strides = [1, 1, 1]} : vector<3x8x8xf32> to vector<1x8x8xf32>
    %19 = vector.shape_cast %18 : vector<1x8x8xf32> to vector<8x8xf32>
    %cst_13 = arith.constant dense<0.000000e+00> : vector<8x16xf32>
    %20 = tpu.matmul %19, %11, %cst_13 {dimension_numbers = #tpu.dot_dimension_numbers<[1], [0], [0], [1], [0, 0, 1, 1], [], []>} : vector<8x8xf32>, vector<8x16xf32>, vector<8x16xf32> -> vector<8x16xf32>
    %21 = arith.addf %17, %20 : vector<8x16xf32>
    %22 = vector.extract_strided_slice %11 {offsets = [0, 1], sizes = [8, 15], strides = [1, 1]} : vector<8x16xf32> to vector<8x15xf32>
    %23 = tpu.concatenate %22, %9 in 1 : vector<8x15xf32>, vector<8x1xf32> -> vector<8x16xf32>
    %24 = vector.extract_strided_slice %12 {offsets = [2, 0, 0], sizes = [1, 8, 8], strides = [1, 1, 1]} : vector<3x8x8xf32> to vector<1x8x8xf32>
    %25 = vector.shape_cast %24 : vector<1x8x8xf32> to vector<8x8xf32>
    %cst_14 = arith.constant dense<0.000000e+00> : vector<8x16xf32>
    %26 = tpu.matmul %25, %23, %cst_14 {dimension_numbers = #tpu.dot_dimension_numbers<[1], [0], [0], [1], [0, 0, 1, 1], [], []>} : vector<8x8xf32>, vector<8x16xf32>, vector<8x16xf32> -> vector<8x16xf32>
    %27 = arith.addf %21, %26 : vector<8x16xf32>
    %c0_15 = arith.constant 0 : index
    %c0_16 = arith.constant 0 : index
    %c0_17 = arith.constant 0 : index
    %28 = vector.load %arg6[%c0_15, %c0_16, %c0_17] : memref<1x8x16xf32, #tpu.memory_space<vmem>>, vector<1x8x16xf32>
    %29 = vector.shape_cast %28 : vector<1x8x16xf32> to vector<8x16xf32>
    %30 = vector.shape_cast %27 : vector<8x16xf32> to vector<1x8x16xf32>
    tpu.vector_store %arg6[%c0_15, %c0_16, %c0_17], %30 {strides = array<i32>} : memref<1x8x16xf32, #tpu.memory_space<vmem>>, vector<1x8x16xf32>,
    %cst_18 = arith.constant dense<0.000000e+00> : vector<8xf32>
    %31 = vector.multi_reduction <add>, %27, %cst_18 [1] : vector<8x16xf32> to vector<8xf32>
    %32 = vector.shape_cast %31 : vector<8xf32> to vector<8x1xf32>
    %33 = arith.mulf %27, %27 : vector<8x16xf32>
    %cst_19 = arith.constant dense<0.000000e+00> : vector<8xf32>
    %34 = vector.multi_reduction <add>, %33, %cst_19 [1] : vector<8x16xf32> to vector<8xf32>
    %35 = vector.shape_cast %34 : vector<8xf32> to vector<8x1xf32>
    %36 = tpu.concatenate %32, %35 in 1 : vector<8x1xf32>, vector<8x1xf32> -> vector<8x2xf32>
    %c0_20 = arith.constant 0 : index
    %c0_21 = arith.constant 0 : index
    %c0_22 = arith.constant 0 : index
    %c0_23 = arith.constant 0 : index
    %37 = vector.load %arg7[%c0_20, %c0_21, %c0_22, %c0_23] : memref<1x1x8x2xf32, #tpu.memory_space<vmem>>, vector<1x1x8x2xf32>
    %38 = vector.shape_cast %37 : vector<1x1x8x2xf32> to vector<8x2xf32>
    %39 = vector.shape_cast %36 : vector<8x2xf32> to vector<1x1x8x2xf32>
    tpu.vector_store %arg7[%c0_20, %c0_21, %c0_22, %c0_23], %39 {strides = array<i32>} : memref<1x1x8x2xf32, #tpu.memory_space<vmem>>, vector<1x1x8x2xf32>,
    return
  }
  func.func @transform_0(%arg0: i32, %arg1: i32) -> (i32, i32, i32) {
    %c0_i32 = arith.constant 0 : i32
    %c0_i32_0 = arith.constant 0 : i32
    return %arg0, %c0_i32, %arg1 : i32, i32, i32
  }
  func.func @transform_1(%arg0: i32, %arg1: i32) -> (i32, i32, i32) {
    %c1_i32 = arith.constant 1 : i32
    %0 = arith.muli %arg1, %c1_i32 : i32
    %c1_i32_0 = arith.constant 1 : i32
    %1 = arith.subi %0, %c1_i32_0 : i32
    %c0_i32 = arith.constant 0 : i32
    %2 = arith.maxsi %1, %c0_i32 : i32
    %c0_i32_1 = arith.constant 0 : i32
    %c0_i32_2 = arith.constant 0 : i32
    return %arg0, %c0_i32_1, %2 : i32, i32, i32
  }
  func.func @transform_2(%arg0: i32, %arg1: i32) -> (i32, i32, i32) {
    %c1_i32 = arith.constant 1 : i32
    %0 = arith.addi %arg1, %c1_i32 : i32
    %c1_i32_0 = arith.constant 1 : i32
    %1 = arith.muli %0, %c1_i32_0 : i32
    %c0_i32 = arith.constant 0 : i32
    %2 = arith.minsi %1, %c0_i32 : i32
    %c0_i32_1 = arith.constant 0 : i32
    %c0_i32_2 = arith.constant 0 : i32
    return %arg0, %c0_i32_1, %2 : i32, i32, i32
  }
  func.func @transform_3(%arg0: i32, %arg1: i32) -> (i32, i32, i32) {
    %c0_i32 = arith.constant 0 : i32
    %c0_i32_0 = arith.constant 0 : i32
    %c0_i32_1 = arith.constant 0 : i32
    %c0_i32_2 = arith.constant 0 : i32
    return %c0_i32, %c0_i32_0, %c0_i32_1 : i32, i32, i32
  }
  func.func @transform_4(%arg0: i32, %arg1: i32) -> (i32, i32, i32) {
    %c0_i32 = arith.constant 0 : i32
    %c0_i32_0 = arith.constant 0 : i32
    return %arg0, %c0_i32, %arg1 : i32, i32, i32
  }
  func.func @transform_5(%arg0: i32, %arg1: i32) -> (i32, i32, i32, i32) {
    %c0_i32 = arith.constant 0 : i32
    %c0_i32_0 = arith.constant 0 : i32
    %c0_i32_1 = arith.constant 0 : i32
    return %arg0, %arg1, %c0_i32, %c0_i32_0 : i32, i32, i32, i32
  }
}

module attributes {stable_mosaic.version = 11 : i64} {
  func.func @_bn_lrelu_conv2_kernel(%arg0: i32, %arg1: i32, %arg2: memref<1x8x16xf32, #tpu.memory_space<vmem>>, %arg3: memref<1x8x16xf32, #tpu.memory_space<vmem>>, %arg4: memref<1x8x16xf32, #tpu.memory_space<vmem>>, %arg5: memref<8x1xf32, #tpu.memory_space<vmem>>, %arg6: memref<8x1xf32, #tpu.memory_space<vmem>>, %arg7: memref<3x8x8xf32, #tpu.memory_space<vmem>>, %arg8: memref<1x8x16xf32, #tpu.memory_space<vmem>>, %arg9: memref<1x1x8x2xf32, #tpu.memory_space<vmem>>) attributes {dimension_semantics = [#tpu.dimension_semantics<parallel>, #tpu.dimension_semantics<parallel>], iteration_bounds = array<i64: 2, 1>, scalar_prefetch = 0 : i64, scratch_operands = 0 : i64, tpu.core_type = #tpu.core_type<tc>, window_params = [{transform_indices = @transform_0, window_bounds = array<i64: 1, 8, 16>}, {transform_indices = @transform_1, window_bounds = array<i64: 1, 8, 16>}, {transform_indices = @transform_2, window_bounds = array<i64: 1, 8, 16>}, {pipeline_mode = #tpu.pipeline_mode<synchronous>, transform_indices = @transform_3, window_bounds = array<i64: 8, 1>}, {pipeline_mode = #tpu.pipeline_mode<synchronous>, transform_indices = @transform_4, window_bounds = array<i64: 8, 1>}, {pipeline_mode = #tpu.pipeline_mode<synchronous>, transform_indices = @transform_5, window_bounds = array<i64: 3, 8, 8>}, {transform_indices = @transform_6, window_bounds = array<i64: 1, 8, 16>}, {transform_indices = @transform_7, window_bounds = array<i64: 1, 1, 8, 2>}]} {
    %c0 = arith.constant 0 : index
    %c0_0 = arith.constant 0 : index
    %0 = vector.load %arg5[%c0, %c0_0] : memref<8x1xf32, #tpu.memory_space<vmem>>, vector<8x1xf32>
    %c0_1 = arith.constant 0 : index
    %c0_2 = arith.constant 0 : index
    %1 = vector.load %arg6[%c0_1, %c0_2] : memref<8x1xf32, #tpu.memory_space<vmem>>, vector<8x1xf32>
    %c0_3 = arith.constant 0 : index
    %c0_4 = arith.constant 0 : index
    %c15 = arith.constant 15 : index
    %2 = vector.load %arg3[%c0_3, %c0_4, %c15] : memref<1x8x16xf32, #tpu.memory_space<vmem>>, vector<1x8x1xf32>
    %3 = vector.shape_cast %2 : vector<1x8x1xf32> to vector<8x1xf32>
    %4 = arith.mulf %3, %0 : vector<8x1xf32>
    %5 = arith.addf %4, %1 : vector<8x1xf32>
    %cst = arith.constant 0.00999999977 : f32
    %6 = vector.broadcast %cst : f32 to vector<8x1xf32>
    %7 = arith.mulf %6, %5 : vector<8x1xf32>
    %8 = arith.maximumf %5, %7 : vector<8x1xf32>
    %c0_5 = arith.constant 0 : index
    %c0_6 = arith.constant 0 : index
    %c0_7 = arith.constant 0 : index
    %9 = vector.load %arg4[%c0_5, %c0_6, %c0_7] : memref<1x8x16xf32, #tpu.memory_space<vmem>>, vector<1x8x1xf32>
    %10 = vector.shape_cast %9 : vector<1x8x1xf32> to vector<8x1xf32>
    %11 = arith.mulf %10, %0 : vector<8x1xf32>
    %12 = arith.addf %11, %1 : vector<8x1xf32>
    %cst_8 = arith.constant 0.00999999977 : f32
    %13 = vector.broadcast %cst_8 : f32 to vector<8x1xf32>
    %14 = arith.mulf %13, %12 : vector<8x1xf32>
    %15 = arith.maximumf %12, %14 : vector<8x1xf32>
    %c0_i32 = arith.constant 0 : i32
    %16 = arith.cmpi eq, %arg1, %c0_i32 : i32
    %cst_9 = arith.constant 0.000000e+00 : f32
    %17 = vector.broadcast %cst_9 : f32 to vector<8x1xf32>
    %18 = arith.select %16, %17, %8 : vector<8x1xf32>
    %c0_i32_10 = arith.constant 0 : i32
    %19 = arith.cmpi eq, %arg1, %c0_i32_10 : i32
    %cst_11 = arith.constant 0.000000e+00 : f32
    %20 = vector.broadcast %cst_11 : f32 to vector<8x1xf32>
    %21 = arith.select %19, %20, %15 : vector<8x1xf32>
    %c0_12 = arith.constant 0 : index
    %c0_13 = arith.constant 0 : index
    %c0_14 = arith.constant 0 : index
    %22 = vector.load %arg2[%c0_12, %c0_13, %c0_14] : memref<1x8x16xf32, #tpu.memory_space<vmem>>, vector<1x8x16xf32>
    %23 = vector.shape_cast %22 : vector<1x8x16xf32> to vector<8x16xf32>
    %24 = vector.broadcast %0 : vector<8x1xf32> to vector<8x16xf32>
    %25 = arith.mulf %23, %24 : vector<8x16xf32>
    %26 = vector.broadcast %1 : vector<8x1xf32> to vector<8x16xf32>
    %27 = arith.addf %25, %26 : vector<8x16xf32>
    %cst_15 = arith.constant 0.00999999977 : f32
    %28 = vector.broadcast %cst_15 : f32 to vector<8x16xf32>
    %29 = arith.mulf %28, %27 : vector<8x16xf32>
    %30 = arith.maximumf %27, %29 : vector<8x16xf32>
    %c0_16 = arith.constant 0 : index
    %c0_17 = arith.constant 0 : index
    %c0_18 = arith.constant 0 : index
    %31 = vector.load %arg7[%c0_16, %c0_17, %c0_18] : memref<3x8x8xf32, #tpu.memory_space<vmem>>, vector<3x8x8xf32>
    %32 = vector.extract_strided_slice %30 {offsets = [0, 0], sizes = [8, 15], strides = [1, 1]} : vector<8x16xf32> to vector<8x15xf32>
    %33 = tpu.concatenate %18, %32 in 1 : vector<8x1xf32>, vector<8x15xf32> -> vector<8x16xf32>
    %34 = vector.extract_strided_slice %31 {offsets = [0, 0, 0], sizes = [1, 8, 8], strides = [1, 1, 1]} : vector<3x8x8xf32> to vector<1x8x8xf32>
    %35 = vector.shape_cast %34 : vector<1x8x8xf32> to vector<8x8xf32>
    %cst_19 = arith.constant dense<0.000000e+00> : vector<8x16xf32>
    %36 = tpu.matmul %35, %33, %cst_19 {dimension_numbers = #tpu.dot_dimension_numbers<[1], [0], [0], [1], [0, 0, 1, 1], [], []>} : vector<8x8xf32>, vector<8x16xf32>, vector<8x16xf32> -> vector<8x16xf32>
    %37 = vector.extract_strided_slice %31 {offsets = [1, 0, 0], sizes = [1, 8, 8], strides = [1, 1, 1]} : vector<3x8x8xf32> to vector<1x8x8xf32>
    %38 = vector.shape_cast %37 : vector<1x8x8xf32> to vector<8x8xf32>
    %cst_20 = arith.constant dense<0.000000e+00> : vector<8x16xf32>
    %39 = tpu.matmul %38, %30, %cst_20 {dimension_numbers = #tpu.dot_dimension_numbers<[1], [0], [0], [1], [0, 0, 1, 1], [], []>} : vector<8x8xf32>, vector<8x16xf32>, vector<8x16xf32> -> vector<8x16xf32>
    %40 = arith.addf %36, %39 : vector<8x16xf32>
    %41 = vector.extract_strided_slice %30 {offsets = [0, 1], sizes = [8, 15], strides = [1, 1]} : vector<8x16xf32> to vector<8x15xf32>
    %42 = tpu.concatenate %41, %21 in 1 : vector<8x15xf32>, vector<8x1xf32> -> vector<8x16xf32>
    %43 = vector.extract_strided_slice %31 {offsets = [2, 0, 0], sizes = [1, 8, 8], strides = [1, 1, 1]} : vector<3x8x8xf32> to vector<1x8x8xf32>
    %44 = vector.shape_cast %43 : vector<1x8x8xf32> to vector<8x8xf32>
    %cst_21 = arith.constant dense<0.000000e+00> : vector<8x16xf32>
    %45 = tpu.matmul %44, %42, %cst_21 {dimension_numbers = #tpu.dot_dimension_numbers<[1], [0], [0], [1], [0, 0, 1, 1], [], []>} : vector<8x8xf32>, vector<8x16xf32>, vector<8x16xf32> -> vector<8x16xf32>
    %46 = arith.addf %40, %45 : vector<8x16xf32>
    %c0_22 = arith.constant 0 : index
    %c0_23 = arith.constant 0 : index
    %c0_24 = arith.constant 0 : index
    %47 = vector.load %arg8[%c0_22, %c0_23, %c0_24] : memref<1x8x16xf32, #tpu.memory_space<vmem>>, vector<1x8x16xf32>
    %48 = vector.shape_cast %47 : vector<1x8x16xf32> to vector<8x16xf32>
    %49 = vector.shape_cast %46 : vector<8x16xf32> to vector<1x8x16xf32>
    tpu.vector_store %arg8[%c0_22, %c0_23, %c0_24], %49 {strides = array<i32>} : memref<1x8x16xf32, #tpu.memory_space<vmem>>, vector<1x8x16xf32>,
    %cst_25 = arith.constant dense<0.000000e+00> : vector<8xf32>
    %50 = vector.multi_reduction <add>, %46, %cst_25 [1] : vector<8x16xf32> to vector<8xf32>
    %51 = vector.shape_cast %50 : vector<8xf32> to vector<8x1xf32>
    %52 = arith.mulf %46, %46 : vector<8x16xf32>
    %cst_26 = arith.constant dense<0.000000e+00> : vector<8xf32>
    %53 = vector.multi_reduction <add>, %52, %cst_26 [1] : vector<8x16xf32> to vector<8xf32>
    %54 = vector.shape_cast %53 : vector<8xf32> to vector<8x1xf32>
    %55 = tpu.concatenate %51, %54 in 1 : vector<8x1xf32>, vector<8x1xf32> -> vector<8x2xf32>
    %c0_27 = arith.constant 0 : index
    %c0_28 = arith.constant 0 : index
    %c0_29 = arith.constant 0 : index
    %c0_30 = arith.constant 0 : index
    %56 = vector.load %arg9[%c0_27, %c0_28, %c0_29, %c0_30] : memref<1x1x8x2xf32, #tpu.memory_space<vmem>>, vector<1x1x8x2xf32>
    %57 = vector.shape_cast %56 : vector<1x1x8x2xf32> to vector<8x2xf32>
    %58 = vector.shape_cast %55 : vector<8x2xf32> to vector<1x1x8x2xf32>
    tpu.vector_store %arg9[%c0_27, %c0_28, %c0_29, %c0_30], %58 {strides = array<i32>} : memref<1x1x8x2xf32, #tpu.memory_space<vmem>>, vector<1x1x8x2xf32>,
    return
  }
  func.func @transform_0(%arg0: i32, %arg1: i32) -> (i32, i32, i32) {
    %c0_i32 = arith.constant 0 : i32
    %c0_i32_0 = arith.constant 0 : i32
    return %arg0, %c0_i32, %arg1 : i32, i32, i32
  }
  func.func @transform_1(%arg0: i32, %arg1: i32) -> (i32, i32, i32) {
    %c1_i32 = arith.constant 1 : i32
    %0 = arith.muli %arg1, %c1_i32 : i32
    %c1_i32_0 = arith.constant 1 : i32
    %1 = arith.subi %0, %c1_i32_0 : i32
    %c0_i32 = arith.constant 0 : i32
    %2 = arith.maxsi %1, %c0_i32 : i32
    %c0_i32_1 = arith.constant 0 : i32
    %c0_i32_2 = arith.constant 0 : i32
    return %arg0, %c0_i32_1, %2 : i32, i32, i32
  }
  func.func @transform_2(%arg0: i32, %arg1: i32) -> (i32, i32, i32) {
    %c1_i32 = arith.constant 1 : i32
    %0 = arith.addi %arg1, %c1_i32 : i32
    %c1_i32_0 = arith.constant 1 : i32
    %1 = arith.muli %0, %c1_i32_0 : i32
    %c0_i32 = arith.constant 0 : i32
    %2 = arith.minsi %1, %c0_i32 : i32
    %c0_i32_1 = arith.constant 0 : i32
    %c0_i32_2 = arith.constant 0 : i32
    return %arg0, %c0_i32_1, %2 : i32, i32, i32
  }
  func.func @transform_3(%arg0: i32, %arg1: i32) -> (i32, i32) {
    %c0_i32 = arith.constant 0 : i32
    %c0_i32_0 = arith.constant 0 : i32
    %c0_i32_1 = arith.constant 0 : i32
    return %c0_i32, %c0_i32_0 : i32, i32
  }
  func.func @transform_4(%arg0: i32, %arg1: i32) -> (i32, i32) {
    %c0_i32 = arith.constant 0 : i32
    %c0_i32_0 = arith.constant 0 : i32
    %c0_i32_1 = arith.constant 0 : i32
    return %c0_i32, %c0_i32_0 : i32, i32
  }
  func.func @transform_5(%arg0: i32, %arg1: i32) -> (i32, i32, i32) {
    %c0_i32 = arith.constant 0 : i32
    %c0_i32_0 = arith.constant 0 : i32
    %c0_i32_1 = arith.constant 0 : i32
    %c0_i32_2 = arith.constant 0 : i32
    return %c0_i32, %c0_i32_0, %c0_i32_1 : i32, i32, i32
  }
  func.func @transform_6(%arg0: i32, %arg1: i32) -> (i32, i32, i32) {
    %c0_i32 = arith.constant 0 : i32
    %c0_i32_0 = arith.constant 0 : i32
    return %arg0, %c0_i32, %arg1 : i32, i32, i32
  }
  func.func @transform_7(%arg0: i32, %arg1: i32) -> (i32, i32, i32, i32) {
    %c0_i32 = arith.constant 0 : i32
    %c0_i32_0 = arith.constant 0 : i32
    %c0_i32_1 = arith.constant 0 : i32
    return %arg0, %arg1, %c0_i32, %c0_i32_0 : i32, i32, i32, i32
  }
}

module attributes {stable_mosaic.version = 11 : i64} {
  func.func @_bn_res_lrelu_kernel(%arg0: i32, %arg1: i32, %arg2: memref<1x8x16xf32, #tpu.memory_space<vmem>>, %arg3: memref<1x8x16xf32, #tpu.memory_space<vmem>>, %arg4: memref<8x1xf32, #tpu.memory_space<vmem>>, %arg5: memref<8x1xf32, #tpu.memory_space<vmem>>, %arg6: memref<1x8x16xf32, #tpu.memory_space<vmem>>) attributes {dimension_semantics = [#tpu.dimension_semantics<parallel>, #tpu.dimension_semantics<parallel>], iteration_bounds = array<i64: 2, 1>, scalar_prefetch = 0 : i64, scratch_operands = 0 : i64, tpu.core_type = #tpu.core_type<tc>, window_params = [{transform_indices = @transform_0, window_bounds = array<i64: 1, 8, 16>}, {transform_indices = @transform_1, window_bounds = array<i64: 1, 8, 16>}, {pipeline_mode = #tpu.pipeline_mode<synchronous>, transform_indices = @transform_2, window_bounds = array<i64: 8, 1>}, {pipeline_mode = #tpu.pipeline_mode<synchronous>, transform_indices = @transform_3, window_bounds = array<i64: 8, 1>}, {transform_indices = @transform_4, window_bounds = array<i64: 1, 8, 16>}]} {
    %c0 = arith.constant 0 : index
    %c0_0 = arith.constant 0 : index
    %c0_1 = arith.constant 0 : index
    %0 = vector.load %arg2[%c0, %c0_0, %c0_1] : memref<1x8x16xf32, #tpu.memory_space<vmem>>, vector<1x8x16xf32>
    %1 = vector.shape_cast %0 : vector<1x8x16xf32> to vector<8x16xf32>
    %c0_2 = arith.constant 0 : index
    %c0_3 = arith.constant 0 : index
    %2 = vector.load %arg4[%c0_2, %c0_3] : memref<8x1xf32, #tpu.memory_space<vmem>>, vector<8x1xf32>
    %3 = vector.broadcast %2 : vector<8x1xf32> to vector<8x16xf32>
    %4 = arith.mulf %1, %3 : vector<8x16xf32>
    %c0_4 = arith.constant 0 : index
    %c0_5 = arith.constant 0 : index
    %5 = vector.load %arg5[%c0_4, %c0_5] : memref<8x1xf32, #tpu.memory_space<vmem>>, vector<8x1xf32>
    %6 = vector.broadcast %5 : vector<8x1xf32> to vector<8x16xf32>
    %7 = arith.addf %4, %6 : vector<8x16xf32>
    %c0_6 = arith.constant 0 : index
    %c0_7 = arith.constant 0 : index
    %c0_8 = arith.constant 0 : index
    %8 = vector.load %arg3[%c0_6, %c0_7, %c0_8] : memref<1x8x16xf32, #tpu.memory_space<vmem>>, vector<1x8x16xf32>
    %9 = vector.shape_cast %8 : vector<1x8x16xf32> to vector<8x16xf32>
    %10 = arith.addf %7, %9 : vector<8x16xf32>
    %cst = arith.constant 0.00999999977 : f32
    %11 = vector.broadcast %cst : f32 to vector<8x16xf32>
    %12 = arith.mulf %11, %10 : vector<8x16xf32>
    %13 = arith.maximumf %10, %12 : vector<8x16xf32>
    %c0_9 = arith.constant 0 : index
    %c0_10 = arith.constant 0 : index
    %c0_11 = arith.constant 0 : index
    %14 = vector.load %arg6[%c0_9, %c0_10, %c0_11] : memref<1x8x16xf32, #tpu.memory_space<vmem>>, vector<1x8x16xf32>
    %15 = vector.shape_cast %14 : vector<1x8x16xf32> to vector<8x16xf32>
    %16 = vector.shape_cast %13 : vector<8x16xf32> to vector<1x8x16xf32>
    tpu.vector_store %arg6[%c0_9, %c0_10, %c0_11], %16 {strides = array<i32>} : memref<1x8x16xf32, #tpu.memory_space<vmem>>, vector<1x8x16xf32>,
    return
  }
  func.func @transform_0(%arg0: i32, %arg1: i32) -> (i32, i32, i32) {
    %c0_i32 = arith.constant 0 : i32
    %c0_i32_0 = arith.constant 0 : i32
    return %arg0, %c0_i32, %arg1 : i32, i32, i32
  }
  func.func @transform_1(%arg0: i32, %arg1: i32) -> (i32, i32, i32) {
    %c0_i32 = arith.constant 0 : i32
    %c0_i32_0 = arith.constant 0 : i32
    return %arg0, %c0_i32, %arg1 : i32, i32, i32
  }
  func.func @transform_2(%arg0: i32, %arg1: i32) -> (i32, i32) {
    %c0_i32 = arith.constant 0 : i32
    %c0_i32_0 = arith.constant 0 : i32
    %c0_i32_1 = arith.constant 0 : i32
    return %c0_i32, %c0_i32_0 : i32, i32
  }
  func.func @transform_3(%arg0: i32, %arg1: i32) -> (i32, i32) {
    %c0_i32 = arith.constant 0 : i32
    %c0_i32_0 = arith.constant 0 : i32
    %c0_i32_1 = arith.constant 0 : i32
    return %c0_i32, %c0_i32_0 : i32, i32
  }
  func.func @transform_4(%arg0: i32, %arg1: i32) -> (i32, i32, i32) {
    %c0_i32 = arith.constant 0 : i32
    %c0_i32_0 = arith.constant 0 : i32
    return %arg0, %c0_i32, %arg1 : i32, i32, i32
  }
}

</mosaic_0001>

<llo_original>
// kernel: basic_block.5
$region0: #{basic_block.5}
  #allocation0 [shape = 'u32[]', space=smem, size = 0x4, offset = 0x4, fixed_abs, tag = 'smem constant byte address 0x4 - core index']
  #allocation1 [shape = 'u32[144,128]{1,0:T(1,128)}', space=vmem, size = 0x12000, scoped, tag = 'internal scratch']
  %s0 = inlined_call_operand.vmem [shape: f32[2,8,16], index: 0, kind: input, shape index: {}]
  %s1 = inlined_call_operand.vmem [shape: f32[2,8,16], index: 1, kind: input, shape index: {}]
  %s2 = inlined_call_operand.vmem [shape: f32[8,1], index: 2, kind: input, shape index: {}]
  %s3 = inlined_call_operand.vmem [shape: f32[8,1], index: 3, kind: input, shape index: {}]
  %s4 = inlined_call_operand.hbm [shape: f32[2,8,16], index: 4, kind: output, shape index: {}]
  %s5 = sld [smem:[#allocation0]]
  $region49: #{basic_block.5} parent=0
    _
  %s7 = ssub.s32 1, %s5
  %s8 = scalar_select 0, %s7, %s5
  $region1: #{basic_block.5} parent=0
    #allocation2 [shape = 'u8[8192]{0}', space=vmem, size = 0x2000, scoped, tag = 'output window, operand 0']
    #allocation3 [shape = 's32[2]{0}', space=sflag, size = 0x8, scoped, tag = 'scoped memory for basic_block.5']
    %9 = vsyncpa [#allocation3], 0
    %s10 = scalar_lea.sflag [#allocation3], 1
    %11 = vsyncpa %s10, 0
    loop: start=0, step=1, limit=4
    $region2: #{basic_block.5} parent=1 // loop_pre_header
      _
    $region3: #{basic_block.5} parent=1 // loop_header
      %s13 = sphi 0, %s17
      %p14 = scmp.ge.s32.totalorder %s13, 4
      %s20 = sphi 0, %s32
      %s21 = sphi 0, %s28
      %s22 = sphi 0, %s20
      %s23 = sphi 0, %s21
      %s24 = sphi 0, %s22
      %s25 = sphi 0, %s23
      %s37 = sphi 0, %s39
      %s40 = sphi 0, %s37
      %s41 = sphi 0, %s40
      %s57 = sphi 0, %s41
      %s65 = sphi 0, %s67
      %s68 = sphi 0, %s65
      %s69 = sphi 0, %s68
      %s85 = sphi 0, %s69
      %s89 = sphi 0, %s89
      %s91 = sphi 0, %s89
      %s92 = sphi 0, %s91
      %s106 = sphi 0, %s92
      %s110 = sphi 0, %s110
      %s112 = sphi 0, %s110
      %s113 = sphi 0, %s112
      %s127 = sphi 0, %s113
      %s135 = sphi 0, %s137
      %s138 = sphi 0, %s135
      %s139 = sphi 0, %s138
      %s155 = sphi 0, %s139
    $region4: #{basic_block.5} parent=1 // loop_header_branch
      %16 = sbr.rel (%p14) target = $region8
    $region5: #{basic_block.5} parent=1 // loop_body
      %s18 = ssub.s32 %s13, 1
      %s19 = ssub.s32 %s13, 2
      %s26 = sadd.s32 1, %s21
      %p27 = scmp.ge.s32.totalorder %s26, 1
      %s28 = scalar_select %p27, 0, %s26
      %s29 = sadd.s32 1, %s20
      %s30 = scalar_select %p27, %s29, %s20
      %p31 = scmp.ge.s32.totalorder %s30, 2
      %s32 = scalar_select %p31, 0, %s30
      %s33 = ssub.s32 %s20, %s32
      %s34 = ssub.s32 %s21, %s28
      %s35 = sor.u32 %s33, %s34
      %p36 = scmp.eq.s32.totalorder %s35, 0
      %s38 = sadd.s32 %s37, 1
      %s39 = scalar_select %p36, %s37, %s38
      %p42 = pneg %p36
      %p43 = scmp.eq.s32.totalorder %s13, 1
      %p44 = por %p42, %p43
      %p45 = scmp.ne.s32.totalorder %s37, %s40
      %p46 = scmp.eq.s32.totalorder %s13, 0
      %p47 = por %p45, %p46
      %p48 = scmp.ne.s32.totalorder %s37, %s40
      %p49 = scmp.eq.s32.totalorder %s18, 1
      %p50 = por %p48, %p49
      %p51 = scmp.ne.s32.totalorder %s40, %s41
      %p52 = scmp.eq.s32.totalorder %s18, 0
      %p53 = por %p51, %p52
      %p54 = scmp.ne.s32.totalorder %s40, %s41
      %p55 = scmp.eq.s32.totalorder %s19, 1
      %p56 = por %p54, %p55
      %p58 = scmp.ne.s32.totalorder %s41, %s57
      %p59 = scmp.eq.s32.totalorder %s19, 0
      %p60 = por %p58, %p59
      %s61 = ssub.s32 %s20, %s32
      %s62 = ssub.s32 %s21, %s28
      %s63 = sor.u32 %s61, %s62
      %p64 = scmp.eq.s32.totalorder %s63, 0
      %s66 = sadd.s32 %s65, 1
      %s67 = scalar_select %p64, %s65, %s66
      %p70 = pneg %p64
      %p71 = scmp.eq.s32.totalorder %s13, 1
      %p72 = por %p70, %p71
      %p73 = scmp.ne.s32.totalorder %s65, %s68
      %p74 = scmp.eq.s32.totalorder %s13, 0
      %p75 = por %p73, %p74
      %p76 = scmp.ne.s32.totalorder %s65, %s68
      %p77 = scmp.eq.s32.totalorder %s18, 1
      %p78 = por %p76, %p77
      %p79 = scmp.ne.s32.totalorder %s68, %s69
      %p80 = scmp.eq.s32.totalorder %s18, 0
      %p81 = por %p79, %p80
      %p82 = scmp.ne.s32.totalorder %s68, %s69
      %p83 = scmp.eq.s32.totalorder %s19, 1
      %p84 = por %p82, %p83
      %p86 = scmp.ne.s32.totalorder %s69, %s85
      %p87 = scmp.eq.s32.totalorder %s19, 0
      %p88 = por %p86, %p87
      %s90 = sadd.s32 %s89, 1
      %p93 = scmp.eq.s32.totalorder %s13, 1
      %p94 = scmp.ne.s32.totalorder %s89, %s91
      %p95 = scmp.eq.s32.totalorder %s13, 0
      %p96 = por %p94, %p95
      %p97 = scmp.ne.s32.totalorder %s89, %s91
      %p98 = scmp.eq.s32.totalorder %s18, 1
      %p99 = por %p97, %p98
      %p100 = scmp.ne.s32.totalorder %s91, %s92
      %p101 = scmp.eq.s32.totalorder %s18, 0
      %p102 = por %p100, %p101
      %p103 = scmp.ne.s32.totalorder %s91, %s92
      %p104 = scmp.eq.s32.totalorder %s19, 1
      %p105 = por %p103, %p104
      %p107 = scmp.ne.s32.totalorder %s92, %s106
      %p108 = scmp.eq.s32.totalorder %s19, 0
      %p109 = por %p107, %p108
      %s111 = sadd.s32 %s110, 1
      %p114 = scmp.eq.s32.totalorder %s13, 1
      %p115 = scmp.ne.s32.totalorder %s110, %s112
      %p116 = scmp.eq.s32.totalorder %s13, 0
      %p117 = por %p115, %p116
      %p118 = scmp.ne.s32.totalorder %s110, %s112
      %p119 = scmp.eq.s32.totalorder %s18, 1
      %p120 = por %p118, %p119
      %p121 = scmp.ne.s32.totalorder %s112, %s113
      %p122 = scmp.eq.s32.totalorder %s18, 0
      %p123 = por %p121, %p122
      %p124 = scmp.ne.s32.totalorder %s112, %s113
      %p125 = scmp.eq.s32.totalorder %s19, 1
      %p126 = por %p124, %p125
      %p128 = scmp.ne.s32.totalorder %s113, %s127
      %p129 = scmp.eq.s32.totalorder %s19, 0
      %p130 = por %p128, %p129
      %s131 = ssub.s32 %s20, %s32
      %s132 = ssub.s32 %s21, %s28
      %s133 = sor.u32 %s131, %s132
      %p134 = scmp.eq.s32.totalorder %s133, 0
      %s136 = sadd.s32 %s135, 1
      %s137 = scalar_select %p134, %s135, %s136
      %p140 = pneg %p134
      %p141 = scmp.eq.s32.totalorder %s13, 1
      %p142 = por %p140, %p141
      %p143 = scmp.ne.s32.totalorder %s135, %s138
      %p144 = scmp.eq.s32.totalorder %s13, 0
      %p145 = por %p143, %p144
      %p146 = scmp.ne.s32.totalorder %s135, %s138
      %p147 = scmp.eq.s32.totalorder %s18, 1
      %p148 = por %p146, %p147
      %p149 = scmp.ne.s32.totalorder %s138, %s139
      %p150 = scmp.eq.s32.totalorder %s18, 0
      %p151 = por %p149, %p150
      %p152 = scmp.ne.s32.totalorder %s138, %s139
      %p153 = scmp.eq.s32.totalorder %s19, 1
      %p154 = por %p152, %p153
      %p156 = scmp.ne.s32.totalorder %s139, %s155
      %p157 = scmp.eq.s32.totalorder %s19, 0
      %p158 = por %p156, %p157
      %p159 = scmp.le.s32.totalorder 1, %s13
      %p160 = scmp.lt.s32.totalorder %s13, 3
      %p161 = pnand %p159, %p160
      %p162 = pneg %p161
      // Predicated region
      $region9: #{basic_block.5} parent=5 // pred_check
        _
      $region10: #{basic_block.5} parent=5 // pred_check_branch
        %164 = sbr.rel (%p161) target = $region12
      $region11: #{basic_block.5} parent=5 // pred_region
        %s165 = ssub.s32 %s13, 1
        // Predicated region
        $region13: #{basic_block.5} parent=11 // pred_check
          %p166 = pneg %p102
        $region14: #{basic_block.5} parent=11 // pred_check_branch
          %168 = sbr.rel (%p166) target = $region16
        $region15: #{basic_block.5} parent=11 // pred_region
          _
        $region16: #{basic_block.5} parent=11 // pred_fallthru
          _
        // Predicated region
        $region17: #{basic_block.5} parent=11 // pred_check
          %p169 = pneg %p123
        $region18: #{basic_block.5} parent=11 // pred_check_branch
          %171 = sbr.rel (%p169) target = $region20
        $region19: #{basic_block.5} parent=11 // pred_region
          _
        $region20: #{basic_block.5} parent=11 // pred_fallthru
          _
      $region12: #{basic_block.5} parent=5 // pred_fallthru
        _
      %p172 = scmp.lt.s32.totalorder %s13, 2
      // Predicated region
      $region21: #{basic_block.5} parent=5 // pred_check
        %p173 = pneg %p172
      $region22: #{basic_block.5} parent=5 // pred_check_branch
        %175 = sbr.rel (%p173) target = $region24
      $region23: #{basic_block.5} parent=5 // pred_region
        // Predicated region
        $region25: #{basic_block.5} parent=23 // pred_check
          %p176 = pneg %p47
        $region26: #{basic_block.5} parent=23 // pred_check_branch
          %178 = sbr.rel (%p176) target = $region28
        $region27: #{basic_block.5} parent=23 // pred_region
          %p179 = scmp.lt.s32.totalorder %s20, 1
          %s180 = scalar_select %p179, %s20, 1
          %p181 = scmp.lt.s32.totalorder %s21, 0
          %s182 = scalar_select %p181, %s21, 0
          %s183 = sadd.s32 %s182, %s180
          %s184 = smul.addr %s183, 8
          %s185 = scalar_lea.vmem %s0, %s184
        $region28: #{basic_block.5} parent=23 // pred_fallthru
          _
        // Predicated region
        $region29: #{basic_block.5} parent=23 // pred_check
          %p186 = pneg %p75
        $region30: #{basic_block.5} parent=23 // pred_check_branch
          %188 = sbr.rel (%p186) target = $region32
        $region31: #{basic_block.5} parent=23 // pred_region
          %p189 = scmp.lt.s32.totalorder %s20, 1
          %s190 = scalar_select %p189, %s20, 1
          %p191 = scmp.lt.s32.totalorder %s21, 0
          %s192 = scalar_select %p191, %s21, 0
          %s193 = sadd.s32 %s192, %s190
          %s194 = smul.addr %s193, 8
          %s195 = scalar_lea.vmem %s1, %s194
        $region32: #{basic_block.5} parent=23 // pred_fallthru
          _
      $region24: #{basic_block.5} parent=5 // pred_fallthru
        _
      %p196 = scmp.le.s32.totalorder 1, %s13
      %p197 = scmp.lt.s32.totalorder %s13, 3
      %p198 = pnand %p196, %p197
      %p199 = pneg %p198
      // Predicated region
      $region33: #{basic_block.5} parent=5 // pred_check
        _
      $region34: #{basic_block.5} parent=5 // pred_check_branch
        %201 = sbr.rel (%p198) target = $region36
      $region35: #{basic_block.5} parent=5 // pred_region
        %s202 = ssub.s32 %s13, 1
        %p203 = scmp.lt.s32.totalorder %s22, 1
        %s204 = scalar_select %p203, %s22, 1
        %p205 = scmp.lt.s32.totalorder %s23, 0
        %s206 = scalar_select %p205, %s23, 0
        %s207 = sadd.s32 %s206, %s204
        %s208 = smul.addr %s207, 8
        %s209 = scalar_lea.vmem %s0, %s208
        %p210 = pneg %p53
        %p211 = pneg %p50
        %p212 = scmp.lt.s32.totalorder %s22, 1
        %s213 = scalar_select %p212, %s22, 1
        %p214 = scmp.lt.s32.totalorder %s23, 0
        %s215 = scalar_select %p214, %s23, 0
        %s216 = sadd.s32 %s215, %s213
        %s217 = smul.addr %s216, 8
        %s218 = scalar_lea.vmem %s1, %s217
        %p219 = pneg %p81
        %p220 = pneg %p78
        %p221 = pneg %p102
        %p222 = pneg %p99
        %p223 = pneg %p123
        %p224 = pneg %p120
        %p225 = pneg %p151
        %p226 = pneg %p148
        %s227 = sand.u32 %s138, 1
        %s228 = scalar_lea.sflag [#allocation3], %s227
        %s229 = sand.u32 %s138, 1
        %s230 = smul.addr %s229, 8
        %s231 = scalar_lea.vmem [#allocation2], %s230
        %p232 = scmp.lt.s32.totalorder %s22, 1
        %s233 = scalar_select %p232, %s22, 1
        %p234 = scmp.lt.s32.totalorder %s23, 0
        %s235 = scalar_select %p234, %s23, 0
        %s236 = sadd.s32 %s235, %s233
        %s237 = smul.addr %s236, 8
        %s238 = scalar_lea.vmem %s0, %s237
        %p239 = scmp.lt.s32.totalorder %s22, 1
        %s240 = scalar_select %p239, %s22, 1
        %p241 = scmp.lt.s32.totalorder %s23, 0
        %s242 = scalar_select %p241, %s23, 0
        %s243 = sadd.s32 %s242, %s240
        %s244 = smul.addr %s243, 8
        %s245 = scalar_lea.vmem %s1, %s244
        %v246 = vld [vmem:[%s238] sm:$0xff]
        %v247 = vld [vmem:[%s2] sm:$0xff]
        %249 = vset.pattern.permute.xlu0 0
        %250 = vperm.xlu0 %249, %v247
        %v251 = vpop.permute.xlu0 %250
        %v253 = vmul.f32 %v246, %v251
        %v254 = vld [vmem:[%s3] sm:$0xff]
        %256 = vset.pattern.permute.xlu0 0
        %257 = vperm.xlu0 %256, %v254
        %v258 = vpop.permute.xlu0 %257
        %v260 = vadd.f32 %v253, %v258
        %v261 = vld [vmem:[%s245] sm:$0xff]
        %v262 = vadd.f32 %v260, %v261
        %v263 = vmul.f32 %v262, 0.01
        %v264 = vmax.f32 %v262, %v263
        %vm265 = vcmask 130048
        %266 = vst.msk [vmem:[%s231] sm:$0xff] %vm265, %v264
        %s267 = sand.u32 %s138, 1
        %s268 = scalar_lea.sflag [#allocation3], %s267
        %s269 = sand.u32 %s138, 1
        %s270 = smul.addr %s269, 8
        %s271 = scalar_lea.vmem [#allocation2], %s270
        // Predicated region
        $region37: #{basic_block.5} parent=35 // pred_check
          %p272 = pneg %p148
        $region38: #{basic_block.5} parent=35 // pred_check_branch
          %274 = sbr.rel (%p272) target = $region40
        $region39: #{basic_block.5} parent=35 // pred_region
          %s276 = ssub.s32 128, 128
          %277 = vsyncadd %s268, %s276
          %s278 = sadd.s32 %s23, %s22
          %s279 = smul.addr %s278, 128
          %s280 = scalar_lea.hbm %s4, %s279
          %s282 = sshll.u32 %s271, 4
          %s283 = int_to_ptr.vmem [resolvable:$true] %s282
          %285 = dma.vmem_to_hbm [thread:$0]  %s283, 128, %s280, %s268
        $region40: #{basic_block.5} parent=35 // pred_fallthru
          _
      $region36: #{basic_block.5} parent=5 // pred_fallthru
        _
      %p286 = scmp.le.s32.totalorder 2, %s13
      // Predicated region
      $region41: #{basic_block.5} parent=5 // pred_check
        %p287 = pneg %p286
      $region42: #{basic_block.5} parent=5 // pred_check_branch
        %289 = sbr.rel (%p287) target = $region44
      $region43: #{basic_block.5} parent=5 // pred_region
        %s290 = ssub.s32 %s13, 2
        // Predicated region
        $region45: #{basic_block.5} parent=43 // pred_check
          %p291 = pneg %p154
        $region46: #{basic_block.5} parent=43 // pred_check_branch
          %293 = sbr.rel (%p291) target = $region48
        $region47: #{basic_block.5} parent=43 // pred_region
          %s294 = sand.u32 %s139, 1
          %s295 = scalar_lea.sflag [#allocation3], %s294
          %s296 = sand.u32 %s139, 1
          %s297 = smul.addr %s296, 8
          %s298 = scalar_lea.vmem [#allocation2], %s297
          %299 = dma.done %s295, 128
        $region48: #{basic_block.5} parent=43 // pred_fallthru
          _
      $region44: #{basic_block.5} parent=5 // pred_fallthru
        _
    $region6: #{basic_block.5} parent=1 // loop_footer
      %s17 = sadd.s32 1, %s13
    $region7: #{basic_block.5} parent=1 // loop_footer_branch
      %12 = sbr.rel target = $region3
    $region8: #{basic_block.5} parent=1 // loop_exit
      _
    %300 = vsyncpa [#allocation3], 1
    %s301 = scalar_lea.sflag [#allocation3], 1
    %302 = vsyncpa %s301, 1

// kernel: basic_block.3
$region0: #{basic_block.3}
  #allocation0 [shape = 'u32[]', space=smem, size = 0x4, offset = 0x4, fixed_abs, tag = 'smem constant byte address 0x4 - core index']
  #allocation1 [shape = 'u32[144,128]{1,0:T(1,128)}', space=vmem, size = 0x12000, scoped, tag = 'internal scratch']
  %s0 = inlined_call_operand.hbm [shape: f32[2,8,16], index: 0, kind: input, shape index: {}, may-alias: {0,1,2}]
  %s1 = inlined_call_operand.hbm [shape: f32[2,8,16], index: 1, kind: input, shape index: {}, may-alias: {0,1,2}]
  %s2 = inlined_call_operand.hbm [shape: f32[2,8,16], index: 2, kind: input, shape index: {}, may-alias: {0,1,2}]
  %s3 = inlined_call_operand.hbm [shape: f32[3,8,8], index: 3, kind: input, shape index: {}]
  %s4 = inlined_call_operand.vmem [shape: f32[2,8,16], index: 4, kind: output, shape index: {0}]
  %s5 = inlined_call_operand.vmem [shape: f32[2,1,8,2], index: 5, kind: output, shape index: {1}]
  %6 = xla_tuple %s4, %s5
  %s7 = sld [smem:[#allocation0]]
  $region73: #{basic_block.3} parent=0
    _
  %s9 = ssub.s32 1, %s7
  %s10 = scalar_select 0, %s9, %s7
  $region1: #{basic_block.3} parent=0
    #allocation2 [shape = 'u8[8192]{0}', space=vmem, size = 0x2000, scoped, tag = 'input window, operand 0']
    #allocation3 [shape = 's32[2]{0}', space=sflag, size = 0x8, scoped, tag = 'scoped memory for basic_block.3']
    #allocation4 [shape = 'u8[8192]{0}', space=vmem, size = 0x2000, scoped, tag = 'input window, operand 1']
    #allocation5 [shape = 's32[2]{0}', space=sflag, size = 0x8, scoped, tag = 'scoped memory for basic_block.3']
    #allocation6 [shape = 'u8[8192]{0}', space=vmem, size = 0x2000, scoped, tag = 'input window, operand 2']
    #allocation7 [shape = 'u8[12288]{0}', space=vmem, size = 0x3000, scoped, tag = 'input window, operand 3, single buffered']
    #allocation8 [shape = 's32[1]{0}', space=sflag, size = 0x4, scoped, tag = 'scoped memory for basic_block.3']
    %11 = vsyncpa [#allocation3], 0
    %s12 = scalar_lea.sflag [#allocation3], 1
    %13 = vsyncpa %s12, 0
    %14 = vsyncpa [#allocation5], 0
    %s15 = scalar_lea.sflag [#allocation5], 1
    %16 = vsyncpa %s15, 0
    %17 = vsyncpa [#allocation8], 0
    loop: start=0, step=1, limit=4
    $region2: #{basic_block.3} parent=1 // loop_pre_header
      _
    $region3: #{basic_block.3} parent=1 // loop_header
      %s19 = sphi 0, %s23
      %p20 = scmp.ge.s32.totalorder %s19, 4
      %s26 = sphi 0, %s38
      %s27 = sphi 0, %s34
      %s28 = sphi 0, %s26
      %s29 = sphi 0, %s27
      %s30 = sphi 0, %s28
      %s31 = sphi 0, %s29
      %s43 = sphi 0, %s45
      %s46 = sphi 0, %s43
      %s47 = sphi 0, %s46
      %s63 = sphi 0, %s47
      %s77 = sphi 0, %s79
      %s80 = sphi 0, %s77
      %s81 = sphi 0, %s80
      %s97 = sphi 0, %s81
      %s111 = sphi 0, %s113
      %s114 = sphi 0, %s111
      %s115 = sphi 0, %s114
      %s131 = sphi 0, %s115
      %s135 = sphi 0, %s135
      %s137 = sphi 0, %s135
      %s138 = sphi 0, %s137
      %s152 = sphi 0, %s138
      %s160 = sphi 0, %s162
      %s163 = sphi 0, %s160
      %s164 = sphi 0, %s163
      %s180 = sphi 0, %s164
      %s188 = sphi 0, %s190
      %s191 = sphi 0, %s188
      %s192 = sphi 0, %s191
      %s208 = sphi 0, %s192
    $region4: #{basic_block.3} parent=1 // loop_header_branch
      %22 = sbr.rel (%p20) target = $region8
    $region5: #{basic_block.3} parent=1 // loop_body
      %s24 = ssub.s32 %s19, 1
      %s25 = ssub.s32 %s19, 2
      %s32 = sadd.s32 1, %s27
      %p33 = scmp.ge.s32.totalorder %s32, 1
      %s34 = scalar_select %p33, 0, %s32
      %s35 = sadd.s32 1, %s26
      %s36 = scalar_select %p33, %s35, %s26
      %p37 = scmp.ge.s32.totalorder %s36, 2
      %s38 = scalar_select %p37, 0, %s36
      %s39 = ssub.s32 %s26, %s38
      %s40 = ssub.s32 %s27, %s34
      %s41 = sor.u32 %s39, %s40
      %p42 = scmp.eq.s32.totalorder %s41, 0
      %s44 = sadd.s32 %s43, 1
      %s45 = scalar_select %p42, %s43, %s44
      %p48 = pneg %p42
      %p49 = scmp.eq.s32.totalorder %s19, 1
      %p50 = por %p48, %p49
      %p51 = scmp.ne.s32.totalorder %s43, %s46
      %p52 = scmp.eq.s32.totalorder %s19, 0
      %p53 = por %p51, %p52
      %p54 = scmp.ne.s32.totalorder %s43, %s46
      %p55 = scmp.eq.s32.totalorder %s24, 1
      %p56 = por %p54, %p55
      %p57 = scmp.ne.s32.totalorder %s46, %s47
      %p58 = scmp.eq.s32.totalorder %s24, 0
      %p59 = por %p57, %p58
      %p60 = scmp.ne.s32.totalorder %s46, %s47
      %p61 = scmp.eq.s32.totalorder %s25, 1
      %p62 = por %p60, %p61
      %p64 = scmp.ne.s32.totalorder %s47, %s63
      %p65 = scmp.eq.s32.totalorder %s25, 0
      %p66 = por %p64, %p65
      %s67 = ssub.s32 %s27, 1
      %p68 = scmp.gt.s32.totalorder %s67, 0
      %s69 = scalar_select %p68, %s67, 0
      %s70 = ssub.s32 %s34, 1
      %p71 = scmp.gt.s32.totalorder %s70, 0
      %s72 = scalar_select %p71, %s70, 0
      %s73 = ssub.s32 %s26, %s38
      %s74 = ssub.s32 %s69, %s72
      %s75 = sor.u32 %s73, %s74
      %p76 = scmp.eq.s32.totalorder %s75, 0
      %s78 = sadd.s32 %s77, 1
      %s79 = scalar_select %p76, %s77, %s78
      %p82 = pneg %p76
      %p83 = scmp.eq.s32.totalorder %s19, 1
      %p84 = por %p82, %p83
      %p85 = scmp.ne.s32.totalorder %s77, %s80
      %p86 = scmp.eq.s32.totalorder %s19, 0
      %p87 = por %p85, %p86
      %p88 = scmp.ne.s32.totalorder %s77, %s80
      %p89 = scmp.eq.s32.totalorder %s24, 1
      %p90 = por %p88, %p89
      %p91 = scmp.ne.s32.totalorder %s80, %s81
      %p92 = scmp.eq.s32.totalorder %s24, 0
      %p93 = por %p91, %p92
      %p94 = scmp.ne.s32.totalorder %s80, %s81
      %p95 = scmp.eq.s32.totalorder %s25, 1
      %p96 = por %p94, %p95
      %p98 = scmp.ne.s32.totalorder %s81, %s97
      %p99 = scmp.eq.s32.totalorder %s25, 0
      %p100 = por %p98, %p99
      %s101 = sadd.s32 %s27, 1
      %p102 = scmp.lt.s32.totalorder %s101, 0
      %s103 = scalar_select %p102, %s101, 0
      %s104 = sadd.s32 %s34, 1
      %p105 = scmp.lt.s32.totalorder %s104, 0
      %s106 = scalar_select %p105, %s104, 0
      %s107 = ssub.s32 %s26, %s38
      %s108 = ssub.s32 %s103, %s106
      %s109 = sor.u32 %s107, %s108
      %p110 = scmp.eq.s32.totalorder %s109, 0
      %s112 = sadd.s32 %s111, 1
      %s113 = scalar_select %p110, %s111, %s112
      %p116 = pneg %p110
      %p117 = scmp.eq.s32.totalorder %s19, 1
      %p118 = por %p116, %p117
      %p119 = scmp.ne.s32.totalorder %s111, %s114
      %p120 = scmp.eq.s32.totalorder %s19, 0
      %p121 = por %p119, %p120
      %p122 = scmp.ne.s32.totalorder %s111, %s114
      %p123 = scmp.eq.s32.totalorder %s24, 1
      %p124 = por %p122, %p123
      %p125 = scmp.ne.s32.totalorder %s114, %s115
      %p126 = scmp.eq.s32.totalorder %s24, 0
      %p127 = por %p125, %p126
      %p128 = scmp.ne.s32.totalorder %s114, %s115
      %p129 = scmp.eq.s32.totalorder %s25, 1
      %p130 = por %p128, %p129
      %p132 = scmp.ne.s32.totalorder %s115, %s131
      %p133 = scmp.eq.s32.totalorder %s25, 0
      %p134 = por %p132, %p133
      %s136 = sadd.s32 %s135, 1
      %p139 = scmp.eq.s32.totalorder %s19, 1
      %p140 = scmp.ne.s32.totalorder %s135, %s137
      %p141 = scmp.eq.s32.totalorder %s19, 0
      %p142 = por %p140, %p141
      %p143 = scmp.ne.s32.totalorder %s135, %s137
      %p144 = scmp.eq.s32.totalorder %s24, 1
      %p145 = por %p143, %p144
      %p146 = scmp.ne.s32.totalorder %s137, %s138
      %p147 = scmp.eq.s32.totalorder %s24, 0
      %p148 = por %p146, %p147
      %p149 = scmp.ne.s32.totalorder %s137, %s138
      %p150 = scmp.eq.s32.totalorder %s25, 1
      %p151 = por %p149, %p150
      %p153 = scmp.ne.s32.totalorder %s138, %s152
      %p154 = scmp.eq.s32.totalorder %s25, 0
      %p155 = por %p153, %p154
      %s156 = ssub.s32 %s26, %s38
      %s157 = ssub.s32 %s27, %s34
      %s158 = sor.u32 %s156, %s157
      %p159 = scmp.eq.s32.totalorder %s158, 0
      %s161 = sadd.s32 %s160, 1
      %s162 = scalar_select %p159, %s160, %s161
      %p165 = pneg %p159
      %p166 = scmp.eq.s32.totalorder %s19, 1
      %p167 = por %p165, %p166
      %p168 = scmp.ne.s32.totalorder %s160, %s163
      %p169 = scmp.eq.s32.totalorder %s19, 0
      %p170 = por %p168, %p169
      %p171 = scmp.ne.s32.totalorder %s160, %s163
      %p172 = scmp.eq.s32.totalorder %s24, 1
      %p173 = por %p171, %p172
      %p174 = scmp.ne.s32.totalorder %s163, %s164
      %p175 = scmp.eq.s32.totalorder %s24, 0
      %p176 = por %p174, %p175
      %p177 = scmp.ne.s32.totalorder %s163, %s164
      %p178 = scmp.eq.s32.totalorder %s25, 1
      %p179 = por %p177, %p178
      %p181 = scmp.ne.s32.totalorder %s164, %s180
      %p182 = scmp.eq.s32.totalorder %s25, 0
      %p183 = por %p181, %p182
      %s184 = ssub.s32 %s26, %s38
      %s185 = ssub.s32 %s27, %s34
      %s186 = sor.u32 %s184, %s185
      %p187 = scmp.eq.s32.totalorder %s186, 0
      %s189 = sadd.s32 %s188, 1
      %s190 = scalar_select %p187, %s188, %s189
      %p193 = pneg %p187
      %p194 = scmp.eq.s32.totalorder %s19, 1
      %p195 = por %p193, %p194
      %p196 = scmp.ne.s32.totalorder %s188, %s191
      %p197 = scmp.eq.s32.totalorder %s19, 0
      %p198 = por %p196, %p197
      %p199 = scmp.ne.s32.totalorder %s188, %s191
      %p200 = scmp.eq.s32.totalorder %s24, 1
      %p201 = por %p199, %p200
      %p202 = scmp.ne.s32.totalorder %s191, %s192
      %p203 = scmp.eq.s32.totalorder %s24, 0
      %p204 = por %p202, %p203
      %p205 = scmp.ne.s32.totalorder %s191, %s192
      %p206 = scmp.eq.s32.totalorder %s25, 1
      %p207 = por %p205, %p206
      %p209 = scmp.ne.s32.totalorder %s192, %s208
      %p210 = scmp.eq.s32.totalorder %s25, 0
      %p211 = por %p209, %p210
      %p212 = scmp.le.s32.totalorder 1, %s19
      %p213 = scmp.lt.s32.totalorder %s19, 3
      %p214 = pnand %p212, %p213
      %p215 = pneg %p214
      // Predicated region
      $region9: #{basic_block.3} parent=5 // pred_check
        _
      $region10: #{basic_block.3} parent=5 // pred_check_branch
        %217 = sbr.rel (%p214) target = $region12
      $region11: #{basic_block.3} parent=5 // pred_region
        %s218 = ssub.s32 %s19, 1
        // Predicated region
        $region13: #{basic_block.3} parent=11 // pred_check
          %p219 = pneg %p148
        $region14: #{basic_block.3} parent=11 // pred_check_branch
          %221 = sbr.rel (%p219) target = $region16
        $region15: #{basic_block.3} parent=11 // pred_region
          %s223 = ssub.s32 384, 384
          %224 = vsyncadd [#allocation8], %s223
          %s225 = sshll.u32 [#allocation7], 4
          %s226 = int_to_ptr.vmem [resolvable:$true] %s225
          %231 = dma.hbm_to_vmem [thread:$0]  %s3, 384, %s226, [#allocation8], 128, 128, 8
        $region16: #{basic_block.3} parent=11 // pred_fallthru
          _
      $region12: #{basic_block.3} parent=5 // pred_fallthru
        _
      %p232 = scmp.lt.s32.totalorder %s19, 2
      // Predicated region
      $region17: #{basic_block.3} parent=5 // pred_check
        %p233 = pneg %p232
      $region18: #{basic_block.3} parent=5 // pred_check_branch
        %235 = sbr.rel (%p233) target = $region20
      $region19: #{basic_block.3} parent=5 // pred_region
        // Predicated region
        $region21: #{basic_block.3} parent=19 // pred_check
          %p236 = pneg %p53
        $region22: #{basic_block.3} parent=19 // pred_check_branch
          %238 = sbr.rel (%p236) target = $region24
        $region23: #{basic_block.3} parent=19 // pred_region
          %s239 = sand.u32 %s43, 1
          %s240 = scalar_lea.sflag [#allocation3], %s239
          %s241 = sand.u32 %s43, 1
          %s242 = smul.addr %s241, 8
          %s243 = scalar_lea.vmem [#allocation2], %s242
          %s245 = ssub.s32 128, 128
          %246 = vsyncadd %s240, %s245
          %s247 = sadd.s32 %s27, %s26
          %s248 = smul.addr %s247, 128
          %s249 = scalar_lea.hbm %s0, %s248
          %s251 = sshll.u32 %s243, 4
          %s252 = int_to_ptr.vmem [resolvable:$true] %s251
          %254 = dma.hbm_to_vmem [thread:$0]  %s249, 128, %s252, %s240
        $region24: #{basic_block.3} parent=19 // pred_fallthru
          _
        // Predicated region
        $region25: #{basic_block.3} parent=19 // pred_check
          %p255 = pneg %p87
        $region26: #{basic_block.3} parent=19 // pred_check_branch
          %257 = sbr.rel (%p255) target = $region28
        $region27: #{basic_block.3} parent=19 // pred_region
          %s258 = sand.u32 %s19, 1
          %s259 = scalar_lea.sflag [#allocation5], %s258
          %s260 = sand.u32 %s77, 1
          %s261 = smul.addr %s260, 8
          %s262 = scalar_lea.vmem [#allocation4], %s261
          %s263 = ssub.s32 %s27, 1
          %p264 = scmp.gt.s32.totalorder %s263, 0
          %s265 = scalar_select %p264, %s263, 0
          %s267 = ssub.s32 128, 128
          %268 = vsyncadd %s259, %s267
          %s269 = sadd.s32 %s265, %s26
          %s270 = smul.addr %s269, 128
          %s271 = scalar_lea.hbm %s1, %s270
          %s273 = sshll.u32 %s262, 4
          %s274 = int_to_ptr.vmem [resolvable:$true] %s273
          %276 = dma.hbm_to_vmem [thread:$0]  %s271, 128, %s274, %s259
        $region28: #{basic_block.3} parent=19 // pred_fallthru
          _
        // Predicated region
        $region29: #{basic_block.3} parent=19 // pred_check
          %p277 = pneg %p121
        $region30: #{basic_block.3} parent=19 // pred_check_branch
          %279 = sbr.rel (%p277) target = $region32
        $region31: #{basic_block.3} parent=19 // pred_region
          %s280 = sand.u32 %s19, 1
          %s281 = scalar_lea.sflag [#allocation5], %s280
          %s282 = sand.u32 %s111, 1
          %s283 = smul.addr %s282, 8
          %s284 = scalar_lea.vmem [#allocation6], %s283
          %s285 = sadd.s32 %s27, 1
          %p286 = scmp.lt.s32.totalorder %s285, 0
          %s287 = scalar_select %p286, %s285, 0
          %s289 = ssub.s32 128, 128
          %290 = vsyncadd %s281, %s289
          %s291 = sadd.s32 %s287, %s26
          %s292 = smul.addr %s291, 128
          %s293 = scalar_lea.hbm %s2, %s292
          %s295 = sshll.u32 %s284, 4
          %s296 = int_to_ptr.vmem [resolvable:$true] %s295
          %298 = dma.hbm_to_vmem [thread:$0]  %s293, 128, %s296, %s281
        $region32: #{basic_block.3} parent=19 // pred_fallthru
          _
      $region20: #{basic_block.3} parent=5 // pred_fallthru
        _
      %p299 = scmp.le.s32.totalorder 1, %s19
      %p300 = scmp.lt.s32.totalorder %s19, 3
      %p301 = pnand %p299, %p300
      %p302 = pneg %p301
      // Predicated region
      $region33: #{basic_block.3} parent=5 // pred_check
        _
      $region34: #{basic_block.3} parent=5 // pred_check_branch
        %304 = sbr.rel (%p301) target = $region36
      $region35: #{basic_block.3} parent=5 // pred_region
        %s305 = ssub.s32 %s19, 1
        %s306 = sand.u32 %s46, 1
        %s307 = scalar_lea.sflag [#allocation3], %s306
        %s308 = sand.u32 %s46, 1
        %s309 = smul.addr %s308, 8
        %s310 = scalar_lea.vmem [#allocation2], %s309
        // Predicated region
        $region37: #{basic_block.3} parent=35 // pred_check
          %p311 = pneg %p59
        $region38: #{basic_block.3} parent=35 // pred_check_branch
          %313 = sbr.rel (%p311) target = $region40
        $region39: #{basic_block.3} parent=35 // pred_region
          %314 = dma.done %s307, 128
        $region40: #{basic_block.3} parent=35 // pred_fallthru
          _
        %s315 = sand.u32 %s24, 1
        %s316 = scalar_lea.sflag [#allocation5], %s315
        %s317 = sand.u32 %s80, 1
        %s318 = smul.addr %s317, 8
        %s319 = scalar_lea.vmem [#allocation4], %s318
        // Predicated region
        $region41: #{basic_block.3} parent=35 // pred_check
          %p320 = pneg %p93
        $region42: #{basic_block.3} parent=35 // pred_check_branch
          %322 = sbr.rel (%p320) target = $region44
        $region43: #{basic_block.3} parent=35 // pred_region
          %323 = dma.done %s316, 128
        $region44: #{basic_block.3} parent=35 // pred_fallthru
          _
        %s324 = sand.u32 %s24, 1
        %s325 = scalar_lea.sflag [#allocation5], %s324
        %s326 = sand.u32 %s114, 1
        %s327 = smul.addr %s326, 8
        %s328 = scalar_lea.vmem [#allocation6], %s327
        // Predicated region
        $region45: #{basic_block.3} parent=35 // pred_check
          %p329 = pneg %p127
        $region46: #{basic_block.3} parent=35 // pred_check_branch
          %331 = sbr.rel (%p329) target = $region48
        $region47: #{basic_block.3} parent=35 // pred_region
          %332 = dma.done %s325, 128
        $region48: #{basic_block.3} parent=35 // pred_fallthru
          _
        // Predicated region
        $region49: #{basic_block.3} parent=35 // pred_check
          %p333 = pneg %p148
        $region50: #{basic_block.3} parent=35 // pred_check_branch
          %335 = sbr.rel (%p333) target = $region52
        $region51: #{basic_block.3} parent=35 // pred_region
          %336 = dma.done [#allocation8], 384
        $region52: #{basic_block.3} parent=35 // pred_fallthru
          _
        %s337 = sand.u32 %s46, 1
        %s338 = scalar_lea.sflag [#allocation3], %s337
        %s339 = sand.u32 %s46, 1
        %s340 = smul.addr %s339, 8
        %s341 = scalar_lea.vmem [#allocation2], %s340
        %p342 = pneg %p59
        %p343 = pneg %p56
        %s344 = sand.u32 %s24, 1
        %s345 = scalar_lea.sflag [#allocation5], %s344
        %s346 = sand.u32 %s80, 1
        %s347 = smul.addr %s346, 8
        %s348 = scalar_lea.vmem [#allocation4], %s347
        %p349 = pneg %p93
        %p350 = pneg %p90
        %s351 = sand.u32 %s24, 1
        %s352 = scalar_lea.sflag [#allocation5], %s351
        %s353 = sand.u32 %s114, 1
        %s354 = smul.addr %s353, 8
        %s355 = scalar_lea.vmem [#allocation6], %s354
        %p356 = pneg %p127
        %p357 = pneg %p124
        %p358 = pneg %p148
        %p359 = pneg %p145
        %p360 = pneg %p176
        %p361 = pneg %p173
        %p362 = scmp.lt.s32.totalorder %s28, 1
        %s363 = scalar_select %p362, %s28, 1
        %p364 = scmp.lt.s32.totalorder %s29, 0
        %s365 = scalar_select %p364, %s29, 0
        %s366 = sadd.s32 %s365, %s363
        %s367 = smul.addr %s366, 8
        %s368 = scalar_lea.vmem %s4, %s367
        %p369 = pneg %p204
        %p370 = pneg %p201
        %p371 = scmp.lt.s32.totalorder %s28, 1
        %s372 = scalar_select %p371, %s28, 1
        %p373 = scmp.lt.s32.totalorder %s29, 0
        %s374 = scalar_select %p373, %s29, 0
        %s375 = sadd.s32 %s374, %s372
        %s376 = smul.addr %s375, 8
        %s377 = scalar_lea.vmem %s5, %s376
        %s378 = ssub.s32 %s29, 1
        %p379 = scmp.gt.s32.totalorder %s378, 0
        %s380 = scalar_select %p379, %s378, 0
        %s381 = sadd.s32 %s29, 1
        %p382 = scmp.lt.s32.totalorder %s381, 0
        %s383 = scalar_select %p382, %s381, 0
        %p384 = scmp.lt.s32.totalorder %s28, 1
        %s385 = scalar_select %p384, %s28, 1
        %p386 = scmp.lt.s32.totalorder %s29, 0
        %s387 = scalar_select %p386, %s29, 0
        %s388 = sadd.s32 %s387, %s385
        %s389 = smul.addr %s388, 8
        %s390 = scalar_lea.vmem %s4, %s389
        %p391 = scmp.lt.s32.totalorder %s28, 1
        %s392 = scalar_select %p391, %s28, 1
        %p393 = scmp.lt.s32.totalorder %s29, 0
        %s394 = scalar_select %p393, %s29, 0
        %s395 = sadd.s32 %s394, %s392
        %s396 = smul.addr %s395, 8
        %s397 = scalar_lea.vmem %s5, %s396
        %v398 = vld [vmem:[%s319] sm:$0xff]
        %v399 = vld [vmem:[%s328] sm:$0xff]
        %p400 = scmp.eq.s32.totalorder %s29, 0
        %s401 = scalar_select %p400, 1, 0
        %v402 = vstv %s401
        %vm403 = vcmp.eq.s32.totalorder %v402, 1
        %v404 = vsel %vm403, 0.0, %v398
        %v405 = vsel %vm403, 0.0, %v399
        %v406 = vld [vmem:[%s310] sm:$0xff]
        %v407 = vld [vmem:[#allocation7] sm:$0xff]
        %v408 = vld [vmem:[#allocation7 + $0x8] sm:$0xff]
        %v409 = vld [vmem:[#allocation7 + $0x10] sm:$0xff]
        %411 = vrot.lane.b32.xlu0 %v404, 113
        %v412 = vpop.permute.xlu0 %411
        %415 = vrot.lane.b32.xlu0 %v406, 1
        %v416 = vpop.permute.xlu0 %415
        %vm418 = vcmask 7168
        %v419 = vsel %vm418, %v412, %v416
        %vm420 = vcmask 64512
        %v422 = vsel %vm420, %v408, 0
        %424 = vmatprep.subr.mxu0 0.0
        %425 = vmatpush1.msra.mxu0 0.0
        %426 = vmatprep.subr.mxu0 0.0
        %427 = vmatpush1.msra.mxu0 0.0
        %428 = vmatprep.subr.mxu0 0.0
        %429 = vmatpush1.msra.mxu0 0.0
        %430 = vmatprep.subr.mxu0 0.0
        %431 = vmatpush1.msra.mxu0 0.0
        %432 = vmatprep.subr.mxu0 0.0
        %433 = vmatpush1.msra.mxu0 0.0
        %434 = vmatprep.subr.mxu0 0.0
        %435 = vmatpush1.msra.mxu0 0.0
        %436 = vmatprep.subr.mxu0 0.0
        %437 = vmatpush1.msra.mxu0 0.0
        %438 = vmatprep.subr.mxu0 0.0
        %439 = vmatpush1.msra.mxu0 0.0
        %440 = vmatprep.subr.mxu0 0.0
        %441 = vmatpush1.msra.mxu0 0.0
        %442 = vmatprep.subr.mxu0 0.0
        %443 = vmatpush1.msra.mxu0 0.0
        %444 = vmatprep.subr.mxu0 0.0
        %445 = vmatpush1.msra.mxu0 0.0
        %446 = vmatprep.subr.mxu0 0.0
        %447 = vmatpush1.msra.mxu0 0.0
        %448 = vmatprep.subr.mxu0 0.0
        %449 = vmatpush1.msra.mxu0 0.0
        %450 = vmatprep.subr.mxu0 0.0
        %451 = vmatpush1.msra.mxu0 0.0
        %452 = vmatprep.subr.mxu0 0.0
        %453 = vmatpush1.msra.mxu0 0.0
        %454 = vmatprep.subr.mxu0 0.0
        %455 = vmatpush1.msra.mxu0 %v406
        %456 = vmatprep.subr.mxu0 0.0
        %457 = vmatpush2.msra.mxu0 0.0
        %458 = vmatprep.subr.mxu0 0.0
        %459 = vmatpush2.msra.mxu0 0.0
        %460 = vmatprep.subr.mxu0 0.0
        %461 = vmatpush2.msra.mxu0 0.0
        %462 = vmatprep.subr.mxu0 0.0
        %463 = vmatpush2.msra.mxu0 0.0
        %464 = vmatprep.subr.mxu0 0.0
        %465 = vmatpush2.msra.mxu0 0.0
        %466 = vmatprep.subr.mxu0 0.0
        %467 = vmatpush2.msra.mxu0 0.0
        %468 = vmatprep.subr.mxu0 0.0
        %469 = vmatpush2.msra.mxu0 0.0
        %470 = vmatprep.subr.mxu0 0.0
        %471 = vmatpush2.msra.mxu0 0.0
        %472 = vmatprep.subr.mxu0 0.0
        %473 = vmatpush2.msra.mxu0 0.0
        %474 = vmatprep.subr.mxu0 0.0
        %475 = vmatpush2.msra.mxu0 0.0
        %476 = vmatprep.subr.mxu0 0.0
        %477 = vmatpush2.msra.mxu0 0.0
        %478 = vmatprep.subr.mxu0 0.0
        %479 = vmatpush2.msra.mxu0 0.0
        %480 = vmatprep.subr.mxu0 0.0
        %481 = vmatpush2.msra.mxu0 0.0
        %482 = vmatprep.subr.mxu0 0.0
        %483 = vmatpush2.msra.mxu0 0.0
        %484 = vmatprep.subr.mxu0 0.0
        %485 = vmatpush2.msra.mxu0 0.0
        %486 = vmatprep.subr.mxu0 0.0
        %487 = vmatpush2.msra.mxu0 0.0
        %488 = vmatprep.mubr.f32.mxu0 0.0
        %489 = vmatmul.mubr.f32.gmra.mxu0 %v422
        %v490 = vpop.f32.mrf.mxu0
        %v491 = vadd.f32 0.0, %v490
        %v492 = vpop.f32.mrf.mxu0
        %493 = vdwg.mxu0
        %v495 = vsel %vm420, %v407, 0
        %497 = vmatprep.subr.mxu0 0.0
        %498 = vmatpush1.msra.mxu0 0.0
        %499 = vmatprep.subr.mxu0 0.0
        %500 = vmatpush1.msra.mxu0 0.0
        %501 = vmatprep.subr.mxu0 0.0
        %502 = vmatpush1.msra.mxu0 0.0
        %503 = vmatprep.subr.mxu0 0.0
        %504 = vmatpush1.msra.mxu0 0.0
        %505 = vmatprep.subr.mxu0 0.0
        %506 = vmatpush1.msra.mxu0 0.0
        %507 = vmatprep.subr.mxu0 0.0
        %508 = vmatpush1.msra.mxu0 0.0
        %509 = vmatprep.subr.mxu0 0.0
        %510 = vmatpush1.msra.mxu0 0.0
        %511 = vmatprep.subr.mxu0 0.0
        %512 = vmatpush1.msra.mxu0 0.0
        %513 = vmatprep.subr.mxu0 0.0
        %514 = vmatpush1.msra.mxu0 0.0
        %515 = vmatprep.subr.mxu0 0.0
        %516 = vmatpush1.msra.mxu0 0.0
        %517 = vmatprep.subr.mxu0 0.0
        %518 = vmatpush1.msra.mxu0 0.0
        %519 = vmatprep.subr.mxu0 0.0
        %520 = vmatpush1.msra.mxu0 0.0
        %521 = vmatprep.subr.mxu0 0.0
        %522 = vmatpush1.msra.mxu0 0.0
        %523 = vmatprep.subr.mxu0 0.0
        %524 = vmatpush1.msra.mxu0 0.0
        %525 = vmatprep.subr.mxu0 0.0
        %526 = vmatpush1.msra.mxu0 0.0
        %527 = vmatprep.subr.mxu0 0.0
        %528 = vmatpush1.msra.mxu0 %v419
        %529 = vmatprep.subr.mxu0 0.0
        %530 = vmatpush2.msra.mxu0 0.0
        %531 = vmatprep.subr.mxu0 0.0
        %532 = vmatpush2.msra.mxu0 0.0
        %533 = vmatprep.subr.mxu0 0.0
        %534 = vmatpush2.msra.mxu0 0.0
        %535 = vmatprep.subr.mxu0 0.0
        %536 = vmatpush2.msra.mxu0 0.0
        %537 = vmatprep.subr.mxu0 0.0
        %538 = vmatpush2.msra.mxu0 0.0
        %539 = vmatprep.subr.mxu0 0.0
        %540 = vmatpush2.msra.mxu0 0.0
        %541 = vmatprep.subr.mxu0 0.0
        %542 = vmatpush2.msra.mxu0 0.0
        %543 = vmatprep.subr.mxu0 0.0
        %544 = vmatpush2.msra.mxu0 0.0
        %545 = vmatprep.subr.mxu0 0.0
        %546 = vmatpush2.msra.mxu0 0.0
        %547 = vmatprep.subr.mxu0 0.0
        %548 = vmatpush2.msra.mxu0 0.0
        %549 = vmatprep.subr.mxu0 0.0
        %550 = vmatpush2.msra.mxu0 0.0
        %551 = vmatprep.subr.mxu0 0.0
        %552 = vmatpush2.msra.mxu0 0.0
        %553 = vmatprep.subr.mxu0 0.0
        %554 = vmatpush2.msra.mxu0 0.0
        %555 = vmatprep.subr.mxu0 0.0
        %556 = vmatpush2.msra.mxu0 0.0
        %557 = vmatprep.subr.mxu0 0.0
        %558 = vmatpush2.msra.mxu0 0.0
        %559 = vmatprep.subr.mxu0 0.0
        %560 = vmatpush2.msra.mxu0 0.0
        %561 = vmatprep.mubr.f32.mxu0 0.0
        %562 = vmatmul.mubr.f32.gmra.mxu0 %v495
        %v563 = vpop.f32.mrf.mxu0
        %v564 = vadd.f32 %v491, %v563
        %v565 = vpop.f32.mrf.mxu0
        %566 = vdwg.mxu0
        %567 = vrot.lane.b32.xlu0 %v406, 127
        %v568 = vpop.permute.xlu0 %567
        %571 = vrot.lane.b32.xlu0 %v405, 15
        %v572 = vpop.permute.xlu0 %571
        %vm574 = vcmask 121856
        %v575 = vsel %vm574, %v568, %v572
        %v577 = vsel %vm420, %v409, 0
        %579 = vmatprep.subr.mxu0 0.0
        %580 = vmatpush1.msra.mxu0 0.0
        %581 = vmatprep.subr.mxu0 0.0
        %582 = vmatpush1.msra.mxu0 0.0
        %583 = vmatprep.subr.mxu0 0.0
        %584 = vmatpush1.msra.mxu0 0.0
        %585 = vmatprep.subr.mxu0 0.0
        %586 = vmatpush1.msra.mxu0 0.0
        %587 = vmatprep.subr.mxu0 0.0
        %588 = vmatpush1.msra.mxu0 0.0
        %589 = vmatprep.subr.mxu0 0.0
        %590 = vmatpush1.msra.mxu0 0.0
        %591 = vmatprep.subr.mxu0 0.0
        %592 = vmatpush1.msra.mxu0 0.0
        %593 = vmatprep.subr.mxu0 0.0
        %594 = vmatpush1.msra.mxu0 0.0
        %595 = vmatprep.subr.mxu0 0.0
        %596 = vmatpush1.msra.mxu0 0.0
        %597 = vmatprep.subr.mxu0 0.0
        %598 = vmatpush1.msra.mxu0 0.0
        %599 = vmatprep.subr.mxu0 0.0
        %600 = vmatpush1.msra.mxu0 0.0
        %601 = vmatprep.subr.mxu0 0.0
        %602 = vmatpush1.msra.mxu0 0.0
        %603 = vmatprep.subr.mxu0 0.0
        %604 = vmatpush1.msra.mxu0 0.0
        %605 = vmatprep.subr.mxu0 0.0
        %606 = vmatpush1.msra.mxu0 0.0
        %607 = vmatprep.subr.mxu0 0.0
        %608 = vmatpush1.msra.mxu0 0.0
        %609 = vmatprep.subr.mxu0 0.0
        %610 = vmatpush1.msra.mxu0 %v575
        %611 = vmatprep.subr.mxu0 0.0
        %612 = vmatpush2.msra.mxu0 0.0
        %613 = vmatprep.subr.mxu0 0.0
        %614 = vmatpush2.msra.mxu0 0.0
        %615 = vmatprep.subr.mxu0 0.0
        %616 = vmatpush2.msra.mxu0 0.0
        %617 = vmatprep.subr.mxu0 0.0
        %618 = vmatpush2.msra.mxu0 0.0
        %619 = vmatprep.subr.mxu0 0.0
        %620 = vmatpush2.msra.mxu0 0.0
        %621 = vmatprep.subr.mxu0 0.0
        %622 = vmatpush2.msra.mxu0 0.0
        %623 = vmatprep.subr.mxu0 0.0
        %624 = vmatpush2.msra.mxu0 0.0
        %625 = vmatprep.subr.mxu0 0.0
        %626 = vmatpush2.msra.mxu0 0.0
        %627 = vmatprep.subr.mxu0 0.0
        %628 = vmatpush2.msra.mxu0 0.0
        %629 = vmatprep.subr.mxu0 0.0
        %630 = vmatpush2.msra.mxu0 0.0
        %631 = vmatprep.subr.mxu0 0.0
        %632 = vmatpush2.msra.mxu0 0.0
        %633 = vmatprep.subr.mxu0 0.0
        %634 = vmatpush2.msra.mxu0 0.0
        %635 = vmatprep.subr.mxu0 0.0
        %636 = vmatpush2.msra.mxu0 0.0
        %637 = vmatprep.subr.mxu0 0.0
        %638 = vmatpush2.msra.mxu0 0.0
        %639 = vmatprep.subr.mxu0 0.0
        %640 = vmatpush2.msra.mxu0 0.0
        %641 = vmatprep.subr.mxu0 0.0
        %642 = vmatpush2.msra.mxu0 0.0
        %643 = vmatprep.mubr.f32.mxu0 0.0
        %644 = vmatmul.mubr.f32.gmra.mxu0 %v577
        %v645 = vpop.f32.mrf.mxu0
        %v646 = vadd.f32 0.0, %v645
        %v647 = vpop.f32.mrf.mxu0
        %648 = vdwg.mxu0
        %v649 = vadd.f32 %v564, %v646
        %vm650 = vcmask 130048
        %651 = vst.msk [vmem:[%s390] sm:$0xff] %vm650, %v649
        %v652 = vsel %vm650, %v649, 0.0
        %653 = vadd.xlane.f32.xlu0 %v652
        %v654 = vpop.xlane.xlu0 %653
        %v655 = vmul.f32 %v649, %v649
        %v656 = vsel %vm650, %v655, 0.0
        %657 = vadd.xlane.f32.xlu0 %v656
        %v658 = vpop.xlane.xlu0 %657
        %v659 = vsel %vm418, %v654, %v658
        %vm660 = vcmask 15360
        %661 = vst.msk [vmem:[%s397] sm:$0xff] %vm660, %v659
        %p662 = scmp.lt.s32.totalorder %s28, 1
        %s663 = scalar_select %p662, %s28, 1
        %p664 = scmp.lt.s32.totalorder %s29, 0
        %s665 = scalar_select %p664, %s29, 0
        %s666 = sadd.s32 %s665, %s663
        %s667 = smul.addr %s666, 8
        %s668 = scalar_lea.vmem %s4, %s667
        %p669 = scmp.lt.s32.totalorder %s28, 1
        %s670 = scalar_select %p669, %s28, 1
        %p671 = scmp.lt.s32.totalorder %s29, 0
        %s672 = scalar_select %p671, %s29, 0
        %s673 = sadd.s32 %s672, %s670
        %s674 = smul.addr %s673, 8
        %s675 = scalar_lea.vmem %s5, %s674
        // Predicated region
        $region53: #{basic_block.3} parent=35 // pred_check
          %p676 = pneg %p173
        $region54: #{basic_block.3} parent=35 // pred_check_branch
          %678 = sbr.rel (%p676) target = $region56
        $region55: #{basic_block.3} parent=35 // pred_region
          _
        $region56: #{basic_block.3} parent=35 // pred_fallthru
          _
        // Predicated region
        $region57: #{basic_block.3} parent=35 // pred_check
          %p679 = pneg %p201
        $region58: #{basic_block.3} parent=35 // pred_check_branch
          %681 = sbr.rel (%p679) target = $region60
        $region59: #{basic_block.3} parent=35 // pred_region
          _
        $region60: #{basic_block.3} parent=35 // pred_fallthru
          _
      $region36: #{basic_block.3} parent=5 // pred_fallthru
        _
      %p682 = scmp.le.s32.totalorder 2, %s19
      // Predicated region
      $region61: #{basic_block.3} parent=5 // pred_check
        %p683 = pneg %p682
      $region62: #{basic_block.3} parent=5 // pred_check_branch
        %685 = sbr.rel (%p683) target = $region64
      $region63: #{basic_block.3} parent=5 // pred_region
        %s686 = ssub.s32 %s19, 2
        // Predicated region
        $region65: #{basic_block.3} parent=63 // pred_check
          %p687 = pneg %p179
        $region66: #{basic_block.3} parent=63 // pred_check_branch
          %689 = sbr.rel (%p687) target = $region68
        $region67: #{basic_block.3} parent=63 // pred_region
          %p690 = scmp.lt.s32.totalorder %s30, 1
          %s691 = scalar_select %p690, %s30, 1
          %p692 = scmp.lt.s32.totalorder %s31, 0
          %s693 = scalar_select %p692, %s31, 0
          %s694 = sadd.s32 %s693, %s691
          %s695 = smul.addr %s694, 8
          %s696 = scalar_lea.vmem %s4, %s695
        $region68: #{basic_block.3} parent=63 // pred_fallthru
          _
        // Predicated region
        $region69: #{basic_block.3} parent=63 // pred_check
          %p697 = pneg %p207
        $region70: #{basic_block.3} parent=63 // pred_check_branch
          %699 = sbr.rel (%p697) target = $region72
        $region71: #{basic_block.3} parent=63 // pred_region
          %p700 = scmp.lt.s32.totalorder %s30, 1
          %s701 = scalar_select %p700, %s30, 1
          %p702 = scmp.lt.s32.totalorder %s31, 0
          %s703 = scalar_select %p702, %s31, 0
          %s704 = sadd.s32 %s703, %s701
          %s705 = smul.addr %s704, 8
          %s706 = scalar_lea.vmem %s5, %s705
        $region72: #{basic_block.3} parent=63 // pred_fallthru
          _
      $region64: #{basic_block.3} parent=5 // pred_fallthru
        _
    $region6: #{basic_block.3} parent=1 // loop_footer
      %s23 = sadd.s32 1, %s19
    $region7: #{basic_block.3} parent=1 // loop_footer_branch
      %18 = sbr.rel target = $region3
    $region8: #{basic_block.3} parent=1 // loop_exit
      _
    %707 = vsyncpa [#allocation3], 1
    %s708 = scalar_lea.sflag [#allocation3], 1
    %709 = vsyncpa %s708, 1
    %710 = vsyncpa [#allocation5], 1
    %s711 = scalar_lea.sflag [#allocation5], 1
    %712 = vsyncpa %s711, 1
    %713 = vsyncpa [#allocation8], 1

// kernel: basic_block.4
$region0: #{basic_block.4}
  #allocation0 [shape = 'u32[]', space=smem, size = 0x4, offset = 0x4, fixed_abs, tag = 'smem constant byte address 0x4 - core index']
  #allocation1 [shape = 'u32[144,128]{1,0:T(1,128)}', space=vmem, size = 0x12000, scoped, tag = 'internal scratch']
  %s0 = inlined_call_operand.vmem [shape: f32[2,8,16], index: 0, kind: input, shape index: {}, may-alias: {0,1,2}]
  %s1 = inlined_call_operand.vmem [shape: f32[2,8,16], index: 1, kind: input, shape index: {}, may-alias: {0,1,2}]
  %s2 = inlined_call_operand.vmem [shape: f32[2,8,16], index: 2, kind: input, shape index: {}, may-alias: {0,1,2}]
  %s3 = inlined_call_operand.vmem [shape: f32[8,1], index: 3, kind: input, shape index: {}]
  %s4 = inlined_call_operand.vmem [shape: f32[8,1], index: 4, kind: input, shape index: {}]
  %s5 = inlined_call_operand.vmem [shape: f32[3,8,8], index: 5, kind: input, shape index: {}]
  %s6 = inlined_call_operand.vmem [shape: f32[2,8,16], index: 6, kind: output, shape index: {0}]
  %s7 = inlined_call_operand.vmem [shape: f32[2,1,8,2], index: 7, kind: output, shape index: {1}]
  %8 = xla_tuple %s6, %s7
  %s9 = sld [smem:[#allocation0]]
  $region65: #{basic_block.4} parent=0
    _
  %s11 = ssub.s32 1, %s9
  %s12 = scalar_select 0, %s11, %s9
  loop: start=0, step=1, limit=4
  $region2: #{basic_block.4} parent=0 // loop_pre_header
    _
  $region3: #{basic_block.4} parent=0 // loop_header
    %s14 = sphi 0, %s18
    %p15 = scmp.ge.s32.totalorder %s14, 4
    %s21 = sphi 0, %s33
    %s22 = sphi 0, %s29
    %s23 = sphi 0, %s21
    %s24 = sphi 0, %s22
    %s25 = sphi 0, %s23
    %s26 = sphi 0, %s24
    %s38 = sphi 0, %s40
    %s41 = sphi 0, %s38
    %s42 = sphi 0, %s41
    %s58 = sphi 0, %s42
    %s72 = sphi 0, %s74
    %s75 = sphi 0, %s72
    %s76 = sphi 0, %s75
    %s92 = sphi 0, %s76
    %s106 = sphi 0, %s108
    %s109 = sphi 0, %s106
    %s110 = sphi 0, %s109
    %s126 = sphi 0, %s110
    %s130 = sphi 0, %s130
    %s132 = sphi 0, %s130
    %s133 = sphi 0, %s132
    %s147 = sphi 0, %s133
    %s151 = sphi 0, %s151
    %s153 = sphi 0, %s151
    %s154 = sphi 0, %s153
    %s168 = sphi 0, %s154
    %s172 = sphi 0, %s172
    %s174 = sphi 0, %s172
    %s175 = sphi 0, %s174
    %s189 = sphi 0, %s175
    %s197 = sphi 0, %s199
    %s200 = sphi 0, %s197
    %s201 = sphi 0, %s200
    %s217 = sphi 0, %s201
    %s225 = sphi 0, %s227
    %s228 = sphi 0, %s225
    %s229 = sphi 0, %s228
    %s245 = sphi 0, %s229
  $region4: #{basic_block.4} parent=0 // loop_header_branch
    %17 = sbr.rel (%p15) target = $region8
  $region5: #{basic_block.4} parent=0 // loop_body
    %s19 = ssub.s32 %s14, 1
    %s20 = ssub.s32 %s14, 2
    %s27 = sadd.s32 1, %s22
    %p28 = scmp.ge.s32.totalorder %s27, 1
    %s29 = scalar_select %p28, 0, %s27
    %s30 = sadd.s32 1, %s21
    %s31 = scalar_select %p28, %s30, %s21
    %p32 = scmp.ge.s32.totalorder %s31, 2
    %s33 = scalar_select %p32, 0, %s31
    %s34 = ssub.s32 %s21, %s33
    %s35 = ssub.s32 %s22, %s29
    %s36 = sor.u32 %s34, %s35
    %p37 = scmp.eq.s32.totalorder %s36, 0
    %s39 = sadd.s32 %s38, 1
    %s40 = scalar_select %p37, %s38, %s39
    %p43 = pneg %p37
    %p44 = scmp.eq.s32.totalorder %s14, 1
    %p45 = por %p43, %p44
    %p46 = scmp.ne.s32.totalorder %s38, %s41
    %p47 = scmp.eq.s32.totalorder %s14, 0
    %p48 = por %p46, %p47
    %p49 = scmp.ne.s32.totalorder %s38, %s41
    %p50 = scmp.eq.s32.totalorder %s19, 1
    %p51 = por %p49, %p50
    %p52 = scmp.ne.s32.totalorder %s41, %s42
    %p53 = scmp.eq.s32.totalorder %s19, 0
    %p54 = por %p52, %p53
    %p55 = scmp.ne.s32.totalorder %s41, %s42
    %p56 = scmp.eq.s32.totalorder %s20, 1
    %p57 = por %p55, %p56
    %p59 = scmp.ne.s32.totalorder %s42, %s58
    %p60 = scmp.eq.s32.totalorder %s20, 0
    %p61 = por %p59, %p60
    %s62 = ssub.s32 %s22, 1
    %p63 = scmp.gt.s32.totalorder %s62, 0
    %s64 = scalar_select %p63, %s62, 0
    %s65 = ssub.s32 %s29, 1
    %p66 = scmp.gt.s32.totalorder %s65, 0
    %s67 = scalar_select %p66, %s65, 0
    %s68 = ssub.s32 %s21, %s33
    %s69 = ssub.s32 %s64, %s67
    %s70 = sor.u32 %s68, %s69
    %p71 = scmp.eq.s32.totalorder %s70, 0
    %s73 = sadd.s32 %s72, 1
    %s74 = scalar_select %p71, %s72, %s73
    %p77 = pneg %p71
    %p78 = scmp.eq.s32.totalorder %s14, 1
    %p79 = por %p77, %p78
    %p80 = scmp.ne.s32.totalorder %s72, %s75
    %p81 = scmp.eq.s32.totalorder %s14, 0
    %p82 = por %p80, %p81
    %p83 = scmp.ne.s32.totalorder %s72, %s75
    %p84 = scmp.eq.s32.totalorder %s19, 1
    %p85 = por %p83, %p84
    %p86 = scmp.ne.s32.totalorder %s75, %s76
    %p87 = scmp.eq.s32.totalorder %s19, 0
    %p88 = por %p86, %p87
    %p89 = scmp.ne.s32.totalorder %s75, %s76
    %p90 = scmp.eq.s32.totalorder %s20, 1
    %p91 = por %p89, %p90
    %p93 = scmp.ne.s32.totalorder %s76, %s92
    %p94 = scmp.eq.s32.totalorder %s20, 0
    %p95 = por %p93, %p94
    %s96 = sadd.s32 %s22, 1
    %p97 = scmp.lt.s32.totalorder %s96, 0
    %s98 = scalar_select %p97, %s96, 0
    %s99 = sadd.s32 %s29, 1
    %p100 = scmp.lt.s32.totalorder %s99, 0
    %s101 = scalar_select %p100, %s99, 0
    %s102 = ssub.s32 %s21, %s33
    %s103 = ssub.s32 %s98, %s101
    %s104 = sor.u32 %s102, %s103
    %p105 = scmp.eq.s32.totalorder %s104, 0
    %s107 = sadd.s32 %s106, 1
    %s108 = scalar_select %p105, %s106, %s107
    %p111 = pneg %p105
    %p112 = scmp.eq.s32.totalorder %s14, 1
    %p113 = por %p111, %p112
    %p114 = scmp.ne.s32.totalorder %s106, %s109
    %p115 = scmp.eq.s32.totalorder %s14, 0
    %p116 = por %p114, %p115
    %p117 = scmp.ne.s32.totalorder %s106, %s109
    %p118 = scmp.eq.s32.totalorder %s19, 1
    %p119 = por %p117, %p118
    %p120 = scmp.ne.s32.totalorder %s109, %s110
    %p121 = scmp.eq.s32.totalorder %s19, 0
    %p122 = por %p120, %p121
    %p123 = scmp.ne.s32.totalorder %s109, %s110
    %p124 = scmp.eq.s32.totalorder %s20, 1
    %p125 = por %p123, %p124
    %p127 = scmp.ne.s32.totalorder %s110, %s126
    %p128 = scmp.eq.s32.totalorder %s20, 0
    %p129 = por %p127, %p128
    %s131 = sadd.s32 %s130, 1
    %p134 = scmp.eq.s32.totalorder %s14, 1
    %p135 = scmp.ne.s32.totalorder %s130, %s132
    %p136 = scmp.eq.s32.totalorder %s14, 0
    %p137 = por %p135, %p136
    %p138 = scmp.ne.s32.totalorder %s130, %s132
    %p139 = scmp.eq.s32.totalorder %s19, 1
    %p140 = por %p138, %p139
    %p141 = scmp.ne.s32.totalorder %s132, %s133
    %p142 = scmp.eq.s32.totalorder %s19, 0
    %p143 = por %p141, %p142
    %p144 = scmp.ne.s32.totalorder %s132, %s133
    %p145 = scmp.eq.s32.totalorder %s20, 1
    %p146 = por %p144, %p145
    %p148 = scmp.ne.s32.totalorder %s133, %s147
    %p149 = scmp.eq.s32.totalorder %s20, 0
    %p150 = por %p148, %p149
    %s152 = sadd.s32 %s151, 1
    %p155 = scmp.eq.s32.totalorder %s14, 1
    %p156 = scmp.ne.s32.totalorder %s151, %s153
    %p157 = scmp.eq.s32.totalorder %s14, 0
    %p158 = por %p156, %p157
    %p159 = scmp.ne.s32.totalorder %s151, %s153
    %p160 = scmp.eq.s32.totalorder %s19, 1
    %p161 = por %p159, %p160
    %p162 = scmp.ne.s32.totalorder %s153, %s154
    %p163 = scmp.eq.s32.totalorder %s19, 0
    %p164 = por %p162, %p163
    %p165 = scmp.ne.s32.totalorder %s153, %s154
    %p166 = scmp.eq.s32.totalorder %s20, 1
    %p167 = por %p165, %p166
    %p169 = scmp.ne.s32.totalorder %s154, %s168
    %p170 = scmp.eq.s32.totalorder %s20, 0
    %p171 = por %p169, %p170
    %s173 = sadd.s32 %s172, 1
    %p176 = scmp.eq.s32.totalorder %s14, 1
    %p177 = scmp.ne.s32.totalorder %s172, %s174
    %p178 = scmp.eq.s32.totalorder %s14, 0
    %p179 = por %p177, %p178
    %p180 = scmp.ne.s32.totalorder %s172, %s174
    %p181 = scmp.eq.s32.totalorder %s19, 1
    %p182 = por %p180, %p181
    %p183 = scmp.ne.s32.totalorder %s174, %s175
    %p184 = scmp.eq.s32.totalorder %s19, 0
    %p185 = por %p183, %p184
    %p186 = scmp.ne.s32.totalorder %s174, %s175
    %p187 = scmp.eq.s32.totalorder %s20, 1
    %p188 = por %p186, %p187
    %p190 = scmp.ne.s32.totalorder %s175, %s189
    %p191 = scmp.eq.s32.totalorder %s20, 0
    %p192 = por %p190, %p191
    %s193 = ssub.s32 %s21, %s33
    %s194 = ssub.s32 %s22, %s29
    %s195 = sor.u32 %s193, %s194
    %p196 = scmp.eq.s32.totalorder %s195, 0
    %s198 = sadd.s32 %s197, 1
    %s199 = scalar_select %p196, %s197, %s198
    %p202 = pneg %p196
    %p203 = scmp.eq.s32.totalorder %s14, 1
    %p204 = por %p202, %p203
    %p205 = scmp.ne.s32.totalorder %s197, %s200
    %p206 = scmp.eq.s32.totalorder %s14, 0
    %p207 = por %p205, %p206
    %p208 = scmp.ne.s32.totalorder %s197, %s200
    %p209 = scmp.eq.s32.totalorder %s19, 1
    %p210 = por %p208, %p209
    %p211 = scmp.ne.s32.totalorder %s200, %s201
    %p212 = scmp.eq.s32.totalorder %s19, 0
    %p213 = por %p211, %p212
    %p214 = scmp.ne.s32.totalorder %s200, %s201
    %p215 = scmp.eq.s32.totalorder %s20, 1
    %p216 = por %p214, %p215
    %p218 = scmp.ne.s32.totalorder %s201, %s217
    %p219 = scmp.eq.s32.totalorder %s20, 0
    %p220 = por %p218, %p219
    %s221 = ssub.s32 %s21, %s33
    %s222 = ssub.s32 %s22, %s29
    %s223 = sor.u32 %s221, %s222
    %p224 = scmp.eq.s32.totalorder %s223, 0
    %s226 = sadd.s32 %s225, 1
    %s227 = scalar_select %p224, %s225, %s226
    %p230 = pneg %p224
    %p231 = scmp.eq.s32.totalorder %s14, 1
    %p232 = por %p230, %p231
    %p233 = scmp.ne.s32.totalorder %s225, %s228
    %p234 = scmp.eq.s32.totalorder %s14, 0
    %p235 = por %p233, %p234
    %p236 = scmp.ne.s32.totalorder %s225, %s228
    %p237 = scmp.eq.s32.totalorder %s19, 1
    %p238 = por %p236, %p237
    %p239 = scmp.ne.s32.totalorder %s228, %s229
    %p240 = scmp.eq.s32.totalorder %s19, 0
    %p241 = por %p239, %p240
    %p242 = scmp.ne.s32.totalorder %s228, %s229
    %p243 = scmp.eq.s32.totalorder %s20, 1
    %p244 = por %p242, %p243
    %p246 = scmp.ne.s32.totalorder %s229, %s245
    %p247 = scmp.eq.s32.totalorder %s20, 0
    %p248 = por %p246, %p247
    %p249 = scmp.le.s32.totalorder 1, %s14
    %p250 = scmp.lt.s32.totalorder %s14, 3
    %p251 = pnand %p249, %p250
    %p252 = pneg %p251
    // Predicated region
    $region9: #{basic_block.4} parent=5 // pred_check
      _
    $region10: #{basic_block.4} parent=5 // pred_check_branch
      %254 = sbr.rel (%p251) target = $region12
    $region11: #{basic_block.4} parent=5 // pred_region
      %s255 = ssub.s32 %s14, 1
      // Predicated region
      $region13: #{basic_block.4} parent=11 // pred_check
        %p256 = pneg %p143
      $region14: #{basic_block.4} parent=11 // pred_check_branch
        %258 = sbr.rel (%p256) target = $region16
      $region15: #{basic_block.4} parent=11 // pred_region
        _
      $region16: #{basic_block.4} parent=11 // pred_fallthru
        _
      // Predicated region
      $region17: #{basic_block.4} parent=11 // pred_check
        %p259 = pneg %p164
      $region18: #{basic_block.4} parent=11 // pred_check_branch
        %261 = sbr.rel (%p259) target = $region20
      $region19: #{basic_block.4} parent=11 // pred_region
        _
      $region20: #{basic_block.4} parent=11 // pred_fallthru
        _
      // Predicated region
      $region21: #{basic_block.4} parent=11 // pred_check
        %p262 = pneg %p185
      $region22: #{basic_block.4} parent=11 // pred_check_branch
        %264 = sbr.rel (%p262) target = $region24
      $region23: #{basic_block.4} parent=11 // pred_region
        _
      $region24: #{basic_block.4} parent=11 // pred_fallthru
        _
    $region12: #{basic_block.4} parent=5 // pred_fallthru
      _
    %p265 = scmp.lt.s32.totalorder %s14, 2
    // Predicated region
    $region25: #{basic_block.4} parent=5 // pred_check
      %p266 = pneg %p265
    $region26: #{basic_block.4} parent=5 // pred_check_branch
      %268 = sbr.rel (%p266) target = $region28
    $region27: #{basic_block.4} parent=5 // pred_region
      // Predicated region
      $region29: #{basic_block.4} parent=27 // pred_check
        %p269 = pneg %p48
      $region30: #{basic_block.4} parent=27 // pred_check_branch
        %271 = sbr.rel (%p269) target = $region32
      $region31: #{basic_block.4} parent=27 // pred_region
        %p272 = scmp.lt.s32.totalorder %s21, 1
        %s273 = scalar_select %p272, %s21, 1
        %p274 = scmp.lt.s32.totalorder %s22, 0
        %s275 = scalar_select %p274, %s22, 0
        %s276 = sadd.s32 %s275, %s273
        %s277 = smul.addr %s276, 8
        %s278 = scalar_lea.vmem %s0, %s277
      $region32: #{basic_block.4} parent=27 // pred_fallthru
        _
      // Predicated region
      $region33: #{basic_block.4} parent=27 // pred_check
        %p279 = pneg %p82
      $region34: #{basic_block.4} parent=27 // pred_check_branch
        %281 = sbr.rel (%p279) target = $region36
      $region35: #{basic_block.4} parent=27 // pred_region
        %s282 = ssub.s32 %s22, 1
        %p283 = scmp.gt.s32.totalorder %s282, 0
        %s284 = scalar_select %p283, %s282, 0
        %p285 = scmp.lt.s32.totalorder %s21, 1
        %s286 = scalar_select %p285, %s21, 1
        %p287 = scmp.lt.s32.totalorder %s284, 0
        %s288 = scalar_select %p287, %s284, 0
        %s289 = sadd.s32 %s288, %s286
        %s290 = smul.addr %s289, 8
        %s291 = scalar_lea.vmem %s1, %s290
        %s292 = ssub.s32 %s22, 1
        %p293 = scmp.gt.s32.totalorder %s292, 0
        %s294 = scalar_select %p293, %s292, 0
      $region36: #{basic_block.4} parent=27 // pred_fallthru
        _
      // Predicated region
      $region37: #{basic_block.4} parent=27 // pred_check
        %p295 = pneg %p116
      $region38: #{basic_block.4} parent=27 // pred_check_branch
        %297 = sbr.rel (%p295) target = $region40
      $region39: #{basic_block.4} parent=27 // pred_region
        %s298 = sadd.s32 %s22, 1
        %p299 = scmp.lt.s32.totalorder %s298, 0
        %s300 = scalar_select %p299, %s298, 0
        %p301 = scmp.lt.s32.totalorder %s21, 1
        %s302 = scalar_select %p301, %s21, 1
        %p303 = scmp.lt.s32.totalorder %s300, 0
        %s304 = scalar_select %p303, %s300, 0
        %s305 = sadd.s32 %s304, %s302
        %s306 = smul.addr %s305, 8
        %s307 = scalar_lea.vmem %s2, %s306
        %s308 = sadd.s32 %s22, 1
        %p309 = scmp.lt.s32.totalorder %s308, 0
        %s310 = scalar_select %p309, %s308, 0
      $region40: #{basic_block.4} parent=27 // pred_fallthru
        _
    $region28: #{basic_block.4} parent=5 // pred_fallthru
      _
    %p311 = scmp.le.s32.totalorder 1, %s14
    %p312 = scmp.lt.s32.totalorder %s14, 3
    %p313 = pnand %p311, %p312
    %p314 = pneg %p313
    // Predicated region
    $region41: #{basic_block.4} parent=5 // pred_check
      _
    $region42: #{basic_block.4} parent=5 // pred_check_branch
      %316 = sbr.rel (%p313) target = $region44
    $region43: #{basic_block.4} parent=5 // pred_region
      %s317 = ssub.s32 %s14, 1
      %p318 = scmp.lt.s32.totalorder %s23, 1
      %s319 = scalar_select %p318, %s23, 1
      %p320 = scmp.lt.s32.totalorder %s24, 0
      %s321 = scalar_select %p320, %s24, 0
      %s322 = sadd.s32 %s321, %s319
      %s323 = smul.addr %s322, 8
      %s324 = scalar_lea.vmem %s0, %s323
      %p325 = pneg %p54
      %p326 = pneg %p51
      %s327 = ssub.s32 %s24, 1
      %p328 = scmp.gt.s32.totalorder %s327, 0
      %s329 = scalar_select %p328, %s327, 0
      %p330 = scmp.lt.s32.totalorder %s23, 1
      %s331 = scalar_select %p330, %s23, 1
      %p332 = scmp.lt.s32.totalorder %s329, 0
      %s333 = scalar_select %p332, %s329, 0
      %s334 = sadd.s32 %s333, %s331
      %s335 = smul.addr %s334, 8
      %s336 = scalar_lea.vmem %s1, %s335
      %p337 = pneg %p88
      %p338 = pneg %p85
      %s339 = sadd.s32 %s24, 1
      %p340 = scmp.lt.s32.totalorder %s339, 0
      %s341 = scalar_select %p340, %s339, 0
      %p342 = scmp.lt.s32.totalorder %s23, 1
      %s343 = scalar_select %p342, %s23, 1
      %p344 = scmp.lt.s32.totalorder %s341, 0
      %s345 = scalar_select %p344, %s341, 0
      %s346 = sadd.s32 %s345, %s343
      %s347 = smul.addr %s346, 8
      %s348 = scalar_lea.vmem %s2, %s347
      %p349 = pneg %p122
      %p350 = pneg %p119
      %p351 = pneg %p143
      %p352 = pneg %p140
      %p353 = pneg %p164
      %p354 = pneg %p161
      %p355 = pneg %p185
      %p356 = pneg %p182
      %p357 = pneg %p213
      %p358 = pneg %p210
      %p359 = scmp.lt.s32.totalorder %s23, 1
      %s360 = scalar_select %p359, %s23, 1
      %p361 = scmp.lt.s32.totalorder %s24, 0
      %s362 = scalar_select %p361, %s24, 0
      %s363 = sadd.s32 %s362, %s360
      %s364 = smul.addr %s363, 8
      %s365 = scalar_lea.vmem %s6, %s364
      %p366 = pneg %p241
      %p367 = pneg %p238
      %p368 = scmp.lt.s32.totalorder %s23, 1
      %s369 = scalar_select %p368, %s23, 1
      %p370 = scmp.lt.s32.totalorder %s24, 0
      %s371 = scalar_select %p370, %s24, 0
      %s372 = sadd.s32 %s371, %s369
      %s373 = smul.addr %s372, 8
      %s374 = scalar_lea.vmem %s7, %s373
      %p375 = scmp.lt.s32.totalorder %s23, 1
      %s376 = scalar_select %p375, %s23, 1
      %p377 = scmp.lt.s32.totalorder %s24, 0
      %s378 = scalar_select %p377, %s24, 0
      %s379 = sadd.s32 %s378, %s376
      %s380 = smul.addr %s379, 8
      %s381 = scalar_lea.vmem %s0, %s380
      %s382 = ssub.s32 %s24, 1
      %p383 = scmp.gt.s32.totalorder %s382, 0
      %s384 = scalar_select %p383, %s382, 0
      %p385 = scmp.lt.s32.totalorder %s23, 1
      %s386 = scalar_select %p385, %s23, 1
      %p387 = scmp.lt.s32.totalorder %s384, 0
      %s388 = scalar_select %p387, %s384, 0
      %s389 = sadd.s32 %s388, %s386
      %s390 = smul.addr %s389, 8
      %s391 = scalar_lea.vmem %s1, %s390
      %s392 = ssub.s32 %s24, 1
      %p393 = scmp.gt.s32.totalorder %s392, 0
      %s394 = scalar_select %p393, %s392, 0
      %s395 = sadd.s32 %s24, 1
      %p396 = scmp.lt.s32.totalorder %s395, 0
      %s397 = scalar_select %p396, %s395, 0
      %p398 = scmp.lt.s32.totalorder %s23, 1
      %s399 = scalar_select %p398, %s23, 1
      %p400 = scmp.lt.s32.totalorder %s397, 0
      %s401 = scalar_select %p400, %s397, 0
      %s402 = sadd.s32 %s401, %s399
      %s403 = smul.addr %s402, 8
      %s404 = scalar_lea.vmem %s2, %s403
      %s405 = sadd.s32 %s24, 1
      %p406 = scmp.lt.s32.totalorder %s405, 0
      %s407 = scalar_select %p406, %s405, 0
      %p408 = scmp.lt.s32.totalorder %s23, 1
      %s409 = scalar_select %p408, %s23, 1
      %p410 = scmp.lt.s32.totalorder %s24, 0
      %s411 = scalar_select %p410, %s24, 0
      %s412 = sadd.s32 %s411, %s409
      %s413 = smul.addr %s412, 8
      %s414 = scalar_lea.vmem %s6, %s413
      %p415 = scmp.lt.s32.totalorder %s23, 1
      %s416 = scalar_select %p415, %s23, 1
      %p417 = scmp.lt.s32.totalorder %s24, 0
      %s418 = scalar_select %p417, %s24, 0
      %s419 = sadd.s32 %s418, %s416
      %s420 = smul.addr %s419, 8
      %s421 = scalar_lea.vmem %s7, %s420
      %v422 = vld [vmem:[%s3] sm:$0xff]
      %v423 = vld [vmem:[%s4] sm:$0xff]
      %v424 = vld [vmem:[%s391] sm:$0xff]
      %426 = vrot.lane.b32.xlu0 %v422, 15
      %v427 = vpop.permute.xlu0 %426
      %v429 = vmul.f32 %v424, %v427
      %431 = vrot.lane.b32.xlu0 %v423, 15
      %v432 = vpop.permute.xlu0 %431
      %v434 = vadd.f32 %v429, %v432
      %v435 = vmul.f32 %v434, 0.01
      %v436 = vmax.f32 %v434, %v435
      %v437 = vld [vmem:[%s404] sm:$0xff]
      %v438 = vmul.f32 %v437, %v422
      %v439 = vadd.f32 %v438, %v423
      %v440 = vmul.f32 %v439, 0.01
      %v441 = vmax.f32 %v439, %v440
      %p442 = scmp.eq.s32.totalorder %s24, 0
      %s443 = scalar_select %p442, 1, 0
      %v444 = vstv %s443
      %vm445 = vcmp.eq.s32.totalorder %v444, 1
      %v446 = vsel %vm445, 0.0, %v436
      %v447 = vsel %vm445, 0.0, %v441
      %v448 = vld [vmem:[%s381] sm:$0xff]
      %449 = vset.pattern.permute.xlu0 0
      %450 = vperm.xlu0 %449, %v422
      %v451 = vpop.permute.xlu0 %450
      %v453 = vmul.f32 %v448, %v451
      %454 = vset.pattern.permute.xlu0 0
      %455 = vperm.xlu0 %454, %v423
      %v456 = vpop.permute.xlu0 %455
      %v458 = vadd.f32 %v453, %v456
      %v459 = vmul.f32 %v458, 0.01
      %v460 = vmax.f32 %v458, %v459
      %v461 = vld [vmem:[%s5] sm:$0xff]
      %v462 = vld [vmem:[%s5 + $0x8] sm:$0xff]
      %v463 = vld [vmem:[%s5 + $0x10] sm:$0xff]
      %465 = vrot.lane.b32.xlu0 %v446, 113
      %v466 = vpop.permute.xlu0 %465
      %469 = vrot.lane.b32.xlu0 %v460, 1
      %v470 = vpop.permute.xlu0 %469
      %vm472 = vcmask 7168
      %v473 = vsel %vm472, %v466, %v470
      %vm474 = vcmask 64512
      %v476 = vsel %vm474, %v462, 0
      %478 = vmatprep.subr.mxu0 0.0
      %479 = vmatpush1.msra.mxu0 0.0
      %480 = vmatprep.subr.mxu0 0.0
      %481 = vmatpush1.msra.mxu0 0.0
      %482 = vmatprep.subr.mxu0 0.0
      %483 = vmatpush1.msra.mxu0 0.0
      %484 = vmatprep.subr.mxu0 0.0
      %485 = vmatpush1.msra.mxu0 0.0
      %486 = vmatprep.subr.mxu0 0.0
      %487 = vmatpush1.msra.mxu0 0.0
      %488 = vmatprep.subr.mxu0 0.0
      %489 = vmatpush1.msra.mxu0 0.0
      %490 = vmatprep.subr.mxu0 0.0
      %491 = vmatpush1.msra.mxu0 0.0
      %492 = vmatprep.subr.mxu0 0.0
      %493 = vmatpush1.msra.mxu0 0.0
      %494 = vmatprep.subr.mxu0 0.0
      %495 = vmatpush1.msra.mxu0 0.0
      %496 = vmatprep.subr.mxu0 0.0
      %497 = vmatpush1.msra.mxu0 0.0
      %498 = vmatprep.subr.mxu0 0.0
      %499 = vmatpush1.msra.mxu0 0.0
      %500 = vmatprep.subr.mxu0 0.0
      %501 = vmatpush1.msra.mxu0 0.0
      %502 = vmatprep.subr.mxu0 0.0
      %503 = vmatpush1.msra.mxu0 0.0
      %504 = vmatprep.subr.mxu0 0.0
      %505 = vmatpush1.msra.mxu0 0.0
      %506 = vmatprep.subr.mxu0 0.0
      %507 = vmatpush1.msra.mxu0 0.0
      %508 = vmatprep.subr.mxu0 0.0
      %509 = vmatpush1.msra.mxu0 %v460
      %510 = vmatprep.subr.mxu0 0.0
      %511 = vmatpush2.msra.mxu0 0.0
      %512 = vmatprep.subr.mxu0 0.0
      %513 = vmatpush2.msra.mxu0 0.0
      %514 = vmatprep.subr.mxu0 0.0
      %515 = vmatpush2.msra.mxu0 0.0
      %516 = vmatprep.subr.mxu0 0.0
      %517 = vmatpush2.msra.mxu0 0.0
      %518 = vmatprep.subr.mxu0 0.0
      %519 = vmatpush2.msra.mxu0 0.0
      %520 = vmatprep.subr.mxu0 0.0
      %521 = vmatpush2.msra.mxu0 0.0
      %522 = vmatprep.subr.mxu0 0.0
      %523 = vmatpush2.msra.mxu0 0.0
      %524 = vmatprep.subr.mxu0 0.0
      %525 = vmatpush2.msra.mxu0 0.0
      %526 = vmatprep.subr.mxu0 0.0
      %527 = vmatpush2.msra.mxu0 0.0
      %528 = vmatprep.subr.mxu0 0.0
      %529 = vmatpush2.msra.mxu0 0.0
      %530 = vmatprep.subr.mxu0 0.0
      %531 = vmatpush2.msra.mxu0 0.0
      %532 = vmatprep.subr.mxu0 0.0
      %533 = vmatpush2.msra.mxu0 0.0
      %534 = vmatprep.subr.mxu0 0.0
      %535 = vmatpush2.msra.mxu0 0.0
      %536 = vmatprep.subr.mxu0 0.0
      %537 = vmatpush2.msra.mxu0 0.0
      %538 = vmatprep.subr.mxu0 0.0
      %539 = vmatpush2.msra.mxu0 0.0
      %540 = vmatprep.subr.mxu0 0.0
      %541 = vmatpush2.msra.mxu0 0.0
      %542 = vmatprep.mubr.f32.mxu0 0.0
      %543 = vmatmul.mubr.f32.gmra.mxu0 %v476
      %v544 = vpop.f32.mrf.mxu0
      %v545 = vadd.f32 0.0, %v544
      %v546 = vpop.f32.mrf.mxu0
      %547 = vdwg.mxu0
      %v549 = vsel %vm474, %v461, 0
      %551 = vmatprep.subr.mxu0 0.0
      %552 = vmatpush1.msra.mxu0 0.0
      %553 = vmatprep.subr.mxu0 0.0
      %554 = vmatpush1.msra.mxu0 0.0
      %555 = vmatprep.subr.mxu0 0.0
      %556 = vmatpush1.msra.mxu0 0.0
      %557 = vmatprep.subr.mxu0 0.0
      %558 = vmatpush1.msra.mxu0 0.0
      %559 = vmatprep.subr.mxu0 0.0
      %560 = vmatpush1.msra.mxu0 0.0
      %561 = vmatprep.subr.mxu0 0.0
      %562 = vmatpush1.msra.mxu0 0.0
      %563 = vmatprep.subr.mxu0 0.0
      %564 = vmatpush1.msra.mxu0 0.0
      %565 = vmatprep.subr.mxu0 0.0
      %566 = vmatpush1.msra.mxu0 0.0
      %567 = vmatprep.subr.mxu0 0.0
      %568 = vmatpush1.msra.mxu0 0.0
      %569 = vmatprep.subr.mxu0 0.0
      %570 = vmatpush1.msra.mxu0 0.0
      %571 = vmatprep.subr.mxu0 0.0
      %572 = vmatpush1.msra.mxu0 0.0
      %573 = vmatprep.subr.mxu0 0.0
      %574 = vmatpush1.msra.mxu0 0.0
      %575 = vmatprep.subr.mxu0 0.0
      %576 = vmatpush1.msra.mxu0 0.0
      %577 = vmatprep.subr.mxu0 0.0
      %578 = vmatpush1.msra.mxu0 0.0
      %579 = vmatprep.subr.mxu0 0.0
      %580 = vmatpush1.msra.mxu0 0.0
      %581 = vmatprep.subr.mxu0 0.0
      %582 = vmatpush1.msra.mxu0 %v473
      %583 = vmatprep.subr.mxu0 0.0
      %584 = vmatpush2.msra.mxu0 0.0
      %585 = vmatprep.subr.mxu0 0.0
      %586 = vmatpush2.msra.mxu0 0.0
      %587 = vmatprep.subr.mxu0 0.0
      %588 = vmatpush2.msra.mxu0 0.0
      %589 = vmatprep.subr.mxu0 0.0
      %590 = vmatpush2.msra.mxu0 0.0
      %591 = vmatprep.subr.mxu0 0.0
      %592 = vmatpush2.msra.mxu0 0.0
      %593 = vmatprep.subr.mxu0 0.0
      %594 = vmatpush2.msra.mxu0 0.0
      %595 = vmatprep.subr.mxu0 0.0
      %596 = vmatpush2.msra.mxu0 0.0
      %597 = vmatprep.subr.mxu0 0.0
      %598 = vmatpush2.msra.mxu0 0.0
      %599 = vmatprep.subr.mxu0 0.0
      %600 = vmatpush2.msra.mxu0 0.0
      %601 = vmatprep.subr.mxu0 0.0
      %602 = vmatpush2.msra.mxu0 0.0
      %603 = vmatprep.subr.mxu0 0.0
      %604 = vmatpush2.msra.mxu0 0.0
      %605 = vmatprep.subr.mxu0 0.0
      %606 = vmatpush2.msra.mxu0 0.0
      %607 = vmatprep.subr.mxu0 0.0
      %608 = vmatpush2.msra.mxu0 0.0
      %609 = vmatprep.subr.mxu0 0.0
      %610 = vmatpush2.msra.mxu0 0.0
      %611 = vmatprep.subr.mxu0 0.0
      %612 = vmatpush2.msra.mxu0 0.0
      %613 = vmatprep.subr.mxu0 0.0
      %614 = vmatpush2.msra.mxu0 0.0
      %615 = vmatprep.mubr.f32.mxu0 0.0
      %616 = vmatmul.mubr.f32.gmra.mxu0 %v549
      %v617 = vpop.f32.mrf.mxu0
      %v618 = vadd.f32 %v545, %v617
      %v619 = vpop.f32.mrf.mxu0
      %620 = vdwg.mxu0
      %621 = vrot.lane.b32.xlu0 %v460, 127
      %v622 = vpop.permute.xlu0 %621
      %625 = vrot.lane.b32.xlu0 %v447, 15
      %v626 = vpop.permute.xlu0 %625
      %vm628 = vcmask 121856
      %v629 = vsel %vm628, %v622, %v626
      %v631 = vsel %vm474, %v463, 0
      %633 = vmatprep.subr.mxu0 0.0
      %634 = vmatpush1.msra.mxu0 0.0
      %635 = vmatprep.subr.mxu0 0.0
      %636 = vmatpush1.msra.mxu0 0.0
      %637 = vmatprep.subr.mxu0 0.0
      %638 = vmatpush1.msra.mxu0 0.0
      %639 = vmatprep.subr.mxu0 0.0
      %640 = vmatpush1.msra.mxu0 0.0
      %641 = vmatprep.subr.mxu0 0.0
      %642 = vmatpush1.msra.mxu0 0.0
      %643 = vmatprep.subr.mxu0 0.0
      %644 = vmatpush1.msra.mxu0 0.0
      %645 = vmatprep.subr.mxu0 0.0
      %646 = vmatpush1.msra.mxu0 0.0
      %647 = vmatprep.subr.mxu0 0.0
      %648 = vmatpush1.msra.mxu0 0.0
      %649 = vmatprep.subr.mxu0 0.0
      %650 = vmatpush1.msra.mxu0 0.0
      %651 = vmatprep.subr.mxu0 0.0
      %652 = vmatpush1.msra.mxu0 0.0
      %653 = vmatprep.subr.mxu0 0.0
      %654 = vmatpush1.msra.mxu0 0.0
      %655 = vmatprep.subr.mxu0 0.0
      %656 = vmatpush1.msra.mxu0 0.0
      %657 = vmatprep.subr.mxu0 0.0
      %658 = vmatpush1.msra.mxu0 0.0
      %659 = vmatprep.subr.mxu0 0.0
      %660 = vmatpush1.msra.mxu0 0.0
      %661 = vmatprep.subr.mxu0 0.0
      %662 = vmatpush1.msra.mxu0 0.0
      %663 = vmatprep.subr.mxu0 0.0
      %664 = vmatpush1.msra.mxu0 %v629
      %665 = vmatprep.subr.mxu0 0.0
      %666 = vmatpush2.msra.mxu0 0.0
      %667 = vmatprep.subr.mxu0 0.0
      %668 = vmatpush2.msra.mxu0 0.0
      %669 = vmatprep.subr.mxu0 0.0
      %670 = vmatpush2.msra.mxu0 0.0
      %671 = vmatprep.subr.mxu0 0.0
      %672 = vmatpush2.msra.mxu0 0.0
      %673 = vmatprep.subr.mxu0 0.0
      %674 = vmatpush2.msra.mxu0 0.0
      %675 = vmatprep.subr.mxu0 0.0
      %676 = vmatpush2.msra.mxu0 0.0
      %677 = vmatprep.subr.mxu0 0.0
      %678 = vmatpush2.msra.mxu0 0.0
      %679 = vmatprep.subr.mxu0 0.0
      %680 = vmatpush2.msra.mxu0 0.0
      %681 = vmatprep.subr.mxu0 0.0
      %682 = vmatpush2.msra.mxu0 0.0
      %683 = vmatprep.subr.mxu0 0.0
      %684 = vmatpush2.msra.mxu0 0.0
      %685 = vmatprep.subr.mxu0 0.0
      %686 = vmatpush2.msra.mxu0 0.0
      %687 = vmatprep.subr.mxu0 0.0
      %688 = vmatpush2.msra.mxu0 0.0
      %689 = vmatprep.subr.mxu0 0.0
      %690 = vmatpush2.msra.mxu0 0.0
      %691 = vmatprep.subr.mxu0 0.0
      %692 = vmatpush2.msra.mxu0 0.0
      %693 = vmatprep.subr.mxu0 0.0
      %694 = vmatpush2.msra.mxu0 0.0
      %695 = vmatprep.subr.mxu0 0.0
      %696 = vmatpush2.msra.mxu0 0.0
      %697 = vmatprep.mubr.f32.mxu0 0.0
      %698 = vmatmul.mubr.f32.gmra.mxu0 %v631
      %v699 = vpop.f32.mrf.mxu0
      %v700 = vadd.f32 0.0, %v699
      %v701 = vpop.f32.mrf.mxu0
      %702 = vdwg.mxu0
      %v703 = vadd.f32 %v618, %v700
      %vm704 = vcmask 130048
      %705 = vst.msk [vmem:[%s414] sm:$0xff] %vm704, %v703
      %v706 = vsel %vm704, %v703, 0.0
      %707 = vadd.xlane.f32.xlu0 %v706
      %v708 = vpop.xlane.xlu0 %707
      %v709 = vmul.f32 %v703, %v703
      %v710 = vsel %vm704, %v709, 0.0
      %711 = vadd.xlane.f32.xlu0 %v710
      %v712 = vpop.xlane.xlu0 %711
      %v713 = vsel %vm472, %v708, %v712
      %vm714 = vcmask 15360
      %715 = vst.msk [vmem:[%s421] sm:$0xff] %vm714, %v713
      %p716 = scmp.lt.s32.totalorder %s23, 1
      %s717 = scalar_select %p716, %s23, 1
      %p718 = scmp.lt.s32.totalorder %s24, 0
      %s719 = scalar_select %p718, %s24, 0
      %s720 = sadd.s32 %s719, %s717
      %s721 = smul.addr %s720, 8
      %s722 = scalar_lea.vmem %s6, %s721
      %p723 = scmp.lt.s32.totalorder %s23, 1
      %s724 = scalar_select %p723, %s23, 1
      %p725 = scmp.lt.s32.totalorder %s24, 0
      %s726 = scalar_select %p725, %s24, 0
      %s727 = sadd.s32 %s726, %s724
      %s728 = smul.addr %s727, 8
      %s729 = scalar_lea.vmem %s7, %s728
      // Predicated region
      $region45: #{basic_block.4} parent=43 // pred_check
        %p730 = pneg %p210
      $region46: #{basic_block.4} parent=43 // pred_check_branch
        %732 = sbr.rel (%p730) target = $region48
      $region47: #{basic_block.4} parent=43 // pred_region
        _
      $region48: #{basic_block.4} parent=43 // pred_fallthru
        _
      // Predicated region
      $region49: #{basic_block.4} parent=43 // pred_check
        %p733 = pneg %p238
      $region50: #{basic_block.4} parent=43 // pred_check_branch
        %735 = sbr.rel (%p733) target = $region52
      $region51: #{basic_block.4} parent=43 // pred_region
        _
      $region52: #{basic_block.4} parent=43 // pred_fallthru
        _
    $region44: #{basic_block.4} parent=5 // pred_fallthru
      _
    %p736 = scmp.le.s32.totalorder 2, %s14
    // Predicated region
    $region53: #{basic_block.4} parent=5 // pred_check
      %p737 = pneg %p736
    $region54: #{basic_block.4} parent=5 // pred_check_branch
      %739 = sbr.rel (%p737) target = $region56
    $region55: #{basic_block.4} parent=5 // pred_region
      %s740 = ssub.s32 %s14, 2
      // Predicated region
      $region57: #{basic_block.4} parent=55 // pred_check
        %p741 = pneg %p216
      $region58: #{basic_block.4} parent=55 // pred_check_branch
        %743 = sbr.rel (%p741) target = $region60
      $region59: #{basic_block.4} parent=55 // pred_region
        %p744 = scmp.lt.s32.totalorder %s25, 1
        %s745 = scalar_select %p744, %s25, 1
        %p746 = scmp.lt.s32.totalorder %s26, 0
        %s747 = scalar_select %p746, %s26, 0
        %s748 = sadd.s32 %s747, %s745
        %s749 = smul.addr %s748, 8
        %s750 = scalar_lea.vmem %s6, %s749
      $region60: #{basic_block.4} parent=55 // pred_fallthru
        _
      // Predicated region
      $region61: #{basic_block.4} parent=55 // pred_check
        %p751 = pneg %p244
      $region62: #{basic_block.4} parent=55 // pred_check_branch
        %753 = sbr.rel (%p751) target = $region64
      $region63: #{basic_block.4} parent=55 // pred_region
        %p754 = scmp.lt.s32.totalorder %s25, 1
        %s755 = scalar_select %p754, %s25, 1
        %p756 = scmp.lt.s32.totalorder %s26, 0
        %s757 = scalar_select %p756, %s26, 0
        %s758 = sadd.s32 %s757, %s755
        %s759 = smul.addr %s758, 8
        %s760 = scalar_lea.vmem %s7, %s759
      $region64: #{basic_block.4} parent=55 // pred_fallthru
        _
    $region56: #{basic_block.4} parent=5 // pred_fallthru
      _
  $region6: #{basic_block.4} parent=0 // loop_footer
    %s18 = sadd.s32 1, %s14
  $region7: #{basic_block.4} parent=0 // loop_footer_branch
    %13 = sbr.rel target = $region3
  $region8: #{basic_block.4} parent=0 // loop_exit
    _

</llo_original>
